<compile_context>
chip_gen: v7x
topology: tpu7x:2x2x1
jax: 0.10.0
libtpu: 0.0.40
codegen_flags: <defaults>
</compile_context>

<pallas_src>
import math

import jax
import jax.numpy as jnp
from jax import lax
from jax.experimental import pallas as pl
from jax.experimental.pallas import tpu as pltpu


def _round_up(x, m):
    return ((x + m - 1) // m) * m


def _time_lstm_kernel(decay_ref, xw_ref, uh_ref, wd_ref, bd_ref, out_ref,
                      h_ref, c_ref):
    """One time-chunk of the TimeLSTM recurrence.

    decay_ref: (T_pad,)    f32 SMEM  -- 1 / log(e + dt_t), full sequence
    xw_ref:    (Tc, 4Hp)   f32 VMEM  -- x@Wx + b for this chunk, gates [i,f,o,c]
    uh_ref:    (Hp, 4Hp)   f32 VMEM  -- [U_i|U_f|U_o|U_c], zero-padded
    wd_ref:    (Hp, Hp)    f32 VMEM  -- W_d, zero-padded
    bd_ref:    (1, Hp)     f32 VMEM  -- b_d, zero-padded
    out_ref:   (Tc, Hp)    f32 VMEM  -- hidden states for this chunk
    h_ref/c_ref: (1, Hp)   f32 VMEM scratch -- state carried across chunks
    """
    TC, Hp = out_ref.shape
    chunk = pl.program_id(0)

    @pl.when(chunk == 0)
    def _():
        h_ref[...] = jnp.zeros_like(h_ref)
        c_ref[...] = jnp.zeros_like(c_ref)

    bd = bd_ref[...]                                   # (1, Hp), tiny -> vregs

    def step8(s, carry):
        h, c = carry                                   # (1, Hp) each, f32
        base = pl.multiple_of(s * 8, 8)
        xw_blk = xw_ref[pl.ds(base, 8), :]             # (8, 4Hp), sublane-dense
        rows = []
        for j in range(8):                             # unrolled 8-step group
            decay = decay_ref[chunk * TC + base + j]   # scalar from SMEM
            # Split recurrent matmuls (half the FLOPs of a block-diag fusion);
            # weight refs indexed here (not hoisted) so they feed the MXU from
            # VMEM instead of living in vregs across the loop.
            gates = xw_blk[j:j + 1, :] + jnp.dot(
                h, uh_ref[...], preferred_element_type=jnp.float32)   # (1, 4Hp)
            stm = jnp.tanh(bd + jnp.dot(
                c, wd_ref[...], preferred_element_type=jnp.float32))  # (1, Hp)
            adj_c = (c - stm) + stm * decay            # adjusted previous memory

            i_g = jax.nn.sigmoid(gates[:, 0:Hp])
            f_g = jax.nn.sigmoid(gates[:, Hp:2 * Hp])
            o_g = jax.nn.sigmoid(gates[:, 2 * Hp:3 * Hp])
            c_cand = jnp.tanh(gates[:, 3 * Hp:4 * Hp])

            new_c = f_g * adj_c + i_g * c_cand
            # NOTE: reference TimeLSTM uses tanh(*previous* memory) here.
            new_h = o_g * jnp.tanh(c)

            rows.append(new_h)
            h, c = new_h, new_c
        # One sublane-dense (8, Hp) unmasked store per 8 steps.
        out_ref[pl.ds(base, 8), :] = jnp.concatenate(rows, axis=0).astype(
            out_ref.dtype)
        return (h, c)

    h, c = lax.fori_loop(0, TC // 8, step8, (h_ref[...], c_ref[...]))
    h_ref[...] = h
    c_ref[...] = c


def prepare_time_lstm_weights(params):
    """Pack + zero-pad parameters once per parameter set (hoisted prep)."""
    H = params["W_d"].shape[0]
    D = params["W_i"].shape[0]
    Hp = _round_up(max(H, 1), 128)

    wx = jnp.zeros((D, 4 * Hp), jnp.float32)
    uh = jnp.zeros((Hp, 4 * Hp), jnp.float32)
    b = jnp.zeros((4 * Hp,), jnp.float32)
    for g, name in enumerate(("i", "f", "o", "c")):
        wx = wx.at[:, g * Hp:g * Hp + H].set(params[f"W_{name}"].astype(jnp.float32))
        uh = uh.at[:H, g * Hp:g * Hp + H].set(params[f"U_{name}"].astype(jnp.float32))
        b = b.at[g * Hp:g * Hp + H].set(params[f"b_{name}"].astype(jnp.float32))
    wd = jnp.zeros((Hp, Hp), jnp.float32).at[:H, :H].set(
        params["W_d"].astype(jnp.float32))
    bd = jnp.zeros((1, Hp), jnp.float32).at[0, :H].set(
        params["b_d"].astype(jnp.float32))
    return {"wx": wx, "b": b, "uh": uh, "wd": wd, "bd": bd}


def make_time_lstm(params):
    """Returns a jitted forward(inputs, created_at) -> (T, H) closure."""
    prep = prepare_time_lstm_weights(params)
    H = int(params["W_d"].shape[0])
    Hp = int(prep["wd"].shape[0])

    @jax.jit
    def forward(inputs, created_at):
        inputs = inputs.astype(jnp.float32)
        created_at = created_at.astype(jnp.float32)
        T = inputs.shape[0]

        # Per-step elapsed time and scalar decay 1/log(e + dt); dt[0] = 0.
        # Precondition (same as the PyTorch module): created_at non-decreasing.
        dt = jnp.concatenate(
            [jnp.zeros((1,), jnp.float32), created_at[1:] - created_at[:-1]])
        decay = (1.0 / jnp.log(jnp.float32(math.e) + dt)).astype(jnp.float32)

        # Hoisted input projection: ONE (T, D) @ (D, 4Hp) matmul (lane-padded).
        xw = jnp.dot(inputs, prep["wx"],
                     preferred_element_type=jnp.float32) + prep["b"]

        # Time chunking: chunk size Tc (multiple of 8, <= 128).
        T8 = _round_up(T, 8)
        TC = T8 if T8 <= 128 else 128
        T_pad = _round_up(T, TC)
        num_chunks = T_pad // TC
        if T_pad != T:
            xw = jnp.pad(xw, ((0, T_pad - T), (0, 0)))
            decay = jnp.pad(decay, (0, T_pad - T), constant_values=1.0)

        # VMEM residency estimate (double-buffered blocks + weights + scratch).
        vmem_bytes = 4 * (
            2 * TC * 4 * Hp        # xw chunk (double buffered)
            + 2 * TC * Hp          # out chunk
            + 2 * Hp * 4 * Hp      # uh
            + 2 * Hp * Hp          # wd
            + 2 * Hp               # bd
            + 2 * Hp               # h/c scratch
        )
        vmem_limit = int(min(max(vmem_bytes + (2 << 20), 32 << 20), 64 << 20))

        grid_spec = pltpu.PrefetchScalarGridSpec(
            num_scalar_prefetch=0,
            grid=(num_chunks,),
            in_specs=[
                pl.BlockSpec(memory_space=pltpu.MemorySpace.SMEM),  # decay
                pl.BlockSpec((TC, 4 * Hp), lambda i: (i, 0)),       # xw chunk
                pl.BlockSpec((Hp, 4 * Hp), lambda i: (0, 0)),       # Uh
                pl.BlockSpec((Hp, Hp), lambda i: (0, 0)),           # W_d
                pl.BlockSpec((1, Hp), lambda i: (0, 0)),            # b_d
            ],
            out_specs=pl.BlockSpec((TC, Hp), lambda i: (i, 0)),
            scratch_shapes=[
                pltpu.VMEM((1, Hp), jnp.float32),                   # h carry
                pltpu.VMEM((1, Hp), jnp.float32),                   # c carry
            ],
        )

        out = pl.pallas_call(
            _time_lstm_kernel,
            out_shape=jax.ShapeDtypeStruct((T_pad, Hp), jnp.float32),
            grid_spec=grid_spec,
            compiler_params=pltpu.CompilerParams(
                dimension_semantics=("arbitrary",),
                vmem_limit_bytes=vmem_limit),
        )(decay, xw, prep["uh"], prep["wd"], prep["bd"])

        return out[:T, :H]

    return forward


def time_lstm_reference(inputs, created_at, params):
    """Pure-JAX reference mirroring the PyTorch forward exactly."""
    inputs = inputs.astype(jnp.float32)
    created_at = created_at.astype(jnp.float32)
    H = params["W_d"].shape[0]
    dt = jnp.concatenate(
        [jnp.zeros((1,), jnp.float32), created_at[1:] - created_at[:-1]])

    def step(carry, xs):
        h, c = carry
        x_t, d = xs
        decay = 1.0 / jnp.log(jnp.float32(math.e) + d)
        stm = jnp.tanh(c @ params["W_d"] + params["b_d"])
        adj = (c - stm) + stm * decay
        i = jax.nn.sigmoid(x_t @ params["W_i"] + h @ params["U_i"] + params["b_i"])
        f = jax.nn.sigmoid(x_t @ params["W_f"] + h @ params["U_f"] + params["b_f"])
        o = jax.nn.sigmoid(x_t @ params["W_o"] + h @ params["U_o"] + params["b_o"])
        cc = jnp.tanh(x_t @ params["W_c"] + h @ params["U_c"] + params["b_c"])
        new_c = f * adj + i * cc
        new_h = o * jnp.tanh(c)
        return (new_h, new_c), new_h

    init = (jnp.zeros((H,), jnp.float32), jnp.zeros((H,), jnp.float32))
    _, outs = jax.lax.scan(step, init, (inputs, dt))
    return outs


def init_time_lstm_params(key, input_size, hidden_size):
    """Deterministic init matching nn.init.uniform_(-stdv, stdv), stdv=1/sqrt(H)."""
    stdv = 1.0 / math.sqrt(hidden_size) if hidden_size > 0 else 0.0
    shapes = {
        "W_d": (hidden_size, hidden_size), "U_d": (hidden_size, hidden_size),
        "b_d": (hidden_size,),
        "W_f": (input_size, hidden_size), "U_f": (hidden_size, hidden_size),
        "b_f": (hidden_size,),
        "W_i": (input_size, hidden_size), "U_i": (hidden_size, hidden_size),
        "b_i": (hidden_size,),
        "W_o": (input_size, hidden_size), "U_o": (hidden_size, hidden_size),
        "b_o": (hidden_size,),
        "W_c": (input_size, hidden_size), "U_c": (hidden_size, hidden_size),
        "b_c": (hidden_size,),
    }
    params = {}
    keys = jax.random.split(key, len(shapes))
    for k, (name, shape) in zip(keys, sorted(shapes.items())):
        params[name] = jax.random.uniform(
            k, shape, jnp.float32, minval=-stdv, maxval=stdv)
    return params


if __name__ == "__main__":
    T, D, H = 8, 16, 32

    key = jax.random.PRNGKey(0)
    k_param, k_x, k_t = jax.random.split(key, 3)

    params = init_time_lstm_params(k_param, D, H)
    inputs = jax.random.normal(k_x, (T, D), jnp.float32)
    # Monotonically increasing timestamps -> non-negative elapsed times.
    created_at = jnp.cumsum(
        jax.random.uniform(k_t, (T,), jnp.float32, minval=0.1, maxval=2.0))

    forward = make_time_lstm(params)
    out = forward(inputs, created_at)
    out = jax.block_until_ready(out)

    ref = time_lstm_reference(inputs, created_at, params)
    assert out.shape == (T, H)
    assert jnp.allclose(out, ref, rtol=1e-4, atol=1e-5), (
        f"max abs err {jnp.max(jnp.abs(out - ref))}")

    print("KERNEL_OK")
</pallas_src>

<mosaic_0001>
module attributes {stable_mosaic.version = 11 : i64} {
  func.func @_time_lstm_kernel(%arg0: i32, %arg1: memref<8xf32, #tpu.memory_space<smem>>, %arg2: memref<8x512xf32, #tpu.memory_space<vmem>>, %arg3: memref<128x512xf32, #tpu.memory_space<vmem>>, %arg4: memref<128x128xf32, #tpu.memory_space<vmem>>, %arg5: memref<1x128xf32, #tpu.memory_space<vmem>>, %arg6: memref<8x128xf32, #tpu.memory_space<vmem>>, %arg7: memref<1x128xf32, #tpu.memory_space<vmem>>, %arg8: memref<1x128xf32, #tpu.memory_space<vmem>>) attributes {dimension_semantics = [#tpu.dimension_semantics<arbitrary>], iteration_bounds = array<i64: 1>, scalar_prefetch = 0 : i64, scratch_operands = 2 : i64, tpu.core_type = #tpu.core_type<tc>, window_params = [{transform_indices = @transform_0, window_bounds = array<i64: 8>}, {transform_indices = @transform_1, window_bounds = array<i64: 8, 512>}, {pipeline_mode = #tpu.pipeline_mode<synchronous>, transform_indices = @transform_2, window_bounds = array<i64: 128, 512>}, {pipeline_mode = #tpu.pipeline_mode<synchronous>, transform_indices = @transform_3, window_bounds = array<i64: 128, 128>}, {pipeline_mode = #tpu.pipeline_mode<synchronous>, transform_indices = @transform_4, window_bounds = array<i64: 1, 128>}, {transform_indices = @transform_5, window_bounds = array<i64: 8, 128>}]} {
    %c0_i32 = arith.constant 0 : i32
    %0 = arith.cmpi eq, %arg0, %c0_i32 : i32
    %1 = arith.extui %0 : i1 to i32
    %c0_i32_0 = arith.constant 0 : i32
    %2 = arith.cmpi ne, %1, %c0_i32_0 : i32
    scf.if %2 {
      %cst_94 = arith.constant 0.000000e+00 : f32
      %351 = vector.broadcast %cst_94 : f32 to vector<1x128xf32>
      %c0_95 = arith.constant 0 : index
      %c0_96 = arith.constant 0 : index
      %352 = vector.load %arg7[%c0_95, %c0_96] : memref<1x128xf32, #tpu.memory_space<vmem>>, vector<1x128xf32>
      tpu.vector_store %arg7[%c0_95, %c0_96], %351 {strides = array<i32>} : memref<1x128xf32, #tpu.memory_space<vmem>>, vector<1x128xf32>,
      %cst_97 = arith.constant 0.000000e+00 : f32
      %353 = vector.broadcast %cst_97 : f32 to vector<1x128xf32>
      %c0_98 = arith.constant 0 : index
      %c0_99 = arith.constant 0 : index
      %354 = vector.load %arg8[%c0_98, %c0_99] : memref<1x128xf32, #tpu.memory_space<vmem>>, vector<1x128xf32>
      tpu.vector_store %arg8[%c0_98, %c0_99], %353 {strides = array<i32>} : memref<1x128xf32, #tpu.memory_space<vmem>>, vector<1x128xf32>,
    } else {
    }
    %c0 = arith.constant 0 : index
    %c0_1 = arith.constant 0 : index
    %3 = vector.load %arg5[%c0, %c0_1] : memref<1x128xf32, #tpu.memory_space<vmem>>, vector<1x128xf32>
    %c0_2 = arith.constant 0 : index
    %c0_3 = arith.constant 0 : index
    %4 = vector.load %arg7[%c0_2, %c0_3] : memref<1x128xf32, #tpu.memory_space<vmem>>, vector<1x128xf32>
    %c0_4 = arith.constant 0 : index
    %c0_5 = arith.constant 0 : index
    %5 = vector.load %arg8[%c0_4, %c0_5] : memref<1x128xf32, #tpu.memory_space<vmem>>, vector<1x128xf32>
    %c0_i32_6 = arith.constant 0 : i32
    %c8_i32 = arith.constant 8 : i32
    %6 = arith.muli %c0_i32_6, %c8_i32 : i32
    %7 = tpu.assume_multiple %6, 8 : i32
    %8 = arith.index_cast %7 : i32 to index
    %c0_7 = arith.constant 0 : index
    %9 = vector.load %arg2[%8, %c0_7] : memref<8x512xf32, #tpu.memory_space<vmem>>, vector<8x512xf32>
    %c8_i32_8 = arith.constant 8 : i32
    %10 = arith.muli %arg0, %c8_i32_8 : i32
    %11 = arith.addi %10, %7 : i32
    %c0_i32_9 = arith.constant 0 : i32
    %12 = arith.addi %11, %c0_i32_9 : i32
    %13 = arith.index_cast %12 : i32 to index
    %14 = memref.load %arg1[%13] : memref<8xf32, #tpu.memory_space<smem>>
    %15 = vector.extract_strided_slice %9 {offsets = [0, 0], sizes = [1, 512], strides = [1, 1]} : vector<8x512xf32> to vector<1x512xf32>
    %c0_10 = arith.constant 0 : index
    %c0_11 = arith.constant 0 : index
    %16 = vector.load %arg3[%c0_10, %c0_11] : memref<128x512xf32, #tpu.memory_space<vmem>>, vector<128x512xf32>
    %cst = arith.constant dense<0.000000e+00> : vector<1x512xf32>
    %17 = tpu.matmul %4, %16, %cst {dimension_numbers = #tpu.dot_dimension_numbers<[1], [0], [0], [1], [0, 0, 1, 1], [], []>} : vector<1x128xf32>, vector<128x512xf32>, vector<1x512xf32> -> vector<1x512xf32>
    %18 = arith.addf %15, %17 : vector<1x512xf32>
    %c0_12 = arith.constant 0 : index
    %c0_13 = arith.constant 0 : index
    %19 = vector.load %arg4[%c0_12, %c0_13] : memref<128x128xf32, #tpu.memory_space<vmem>>, vector<128x128xf32>
    %cst_14 = arith.constant dense<0.000000e+00> : vector<1x128xf32>
    %20 = tpu.matmul %5, %19, %cst_14 {dimension_numbers = #tpu.dot_dimension_numbers<[1], [0], [0], [1], [0, 0, 1, 1], [], []>} : vector<1x128xf32>, vector<128x128xf32>, vector<1x128xf32> -> vector<1x128xf32>
    %21 = arith.addf %3, %20 : vector<1x128xf32>
    %22 = math.tanh %21 : vector<1x128xf32>
    %23 = arith.subf %5, %22 : vector<1x128xf32>
    %24 = vector.broadcast %14 : f32 to vector<1x128xf32>
    %25 = arith.mulf %22, %24 : vector<1x128xf32>
    %26 = arith.addf %23, %25 : vector<1x128xf32>
    %27 = vector.extract_strided_slice %18 {offsets = [0, 0], sizes = [1, 128], strides = [1, 1]} : vector<1x512xf32> to vector<1x128xf32>
    %28 = arith.negf %27 : vector<1x128xf32>
    %29 = math.exp %28 : vector<1x128xf32>
    %cst_15 = arith.constant 1.000000e+00 : f32
    %30 = vector.broadcast %cst_15 : f32 to vector<1x128xf32>
    %31 = arith.addf %30, %29 : vector<1x128xf32>
    %32 = arith.divf %30, %31 : vector<1x128xf32>
    %33 = vector.extract_strided_slice %18 {offsets = [0, 128], sizes = [1, 128], strides = [1, 1]} : vector<1x512xf32> to vector<1x128xf32>
    %34 = arith.negf %33 : vector<1x128xf32>
    %35 = math.exp %34 : vector<1x128xf32>
    %cst_16 = arith.constant 1.000000e+00 : f32
    %36 = vector.broadcast %cst_16 : f32 to vector<1x128xf32>
    %37 = arith.addf %36, %35 : vector<1x128xf32>
    %38 = arith.divf %36, %37 : vector<1x128xf32>
    %39 = vector.extract_strided_slice %18 {offsets = [0, 256], sizes = [1, 128], strides = [1, 1]} : vector<1x512xf32> to vector<1x128xf32>
    %40 = arith.negf %39 : vector<1x128xf32>
    %41 = math.exp %40 : vector<1x128xf32>
    %cst_17 = arith.constant 1.000000e+00 : f32
    %42 = vector.broadcast %cst_17 : f32 to vector<1x128xf32>
    %43 = arith.addf %42, %41 : vector<1x128xf32>
    %44 = arith.divf %42, %43 : vector<1x128xf32>
    %45 = vector.extract_strided_slice %18 {offsets = [0, 384], sizes = [1, 128], strides = [1, 1]} : vector<1x512xf32> to vector<1x128xf32>
    %46 = math.tanh %45 : vector<1x128xf32>
    %47 = arith.mulf %38, %26 : vector<1x128xf32>
    %48 = arith.mulf %32, %46 : vector<1x128xf32>
    %49 = arith.addf %47, %48 : vector<1x128xf32>
    %50 = math.tanh %5 : vector<1x128xf32>
    %51 = arith.mulf %44, %50 : vector<1x128xf32>
    %c8_i32_18 = arith.constant 8 : i32
    %52 = arith.muli %arg0, %c8_i32_18 : i32
    %53 = arith.addi %52, %7 : i32
    %c1_i32 = arith.constant 1 : i32
    %54 = arith.addi %53, %c1_i32 : i32
    %55 = arith.index_cast %54 : i32 to index
    %56 = memref.load %arg1[%55] : memref<8xf32, #tpu.memory_space<smem>>
    %57 = vector.extract_strided_slice %9 {offsets = [1, 0], sizes = [1, 512], strides = [1, 1]} : vector<8x512xf32> to vector<1x512xf32>
    %c0_19 = arith.constant 0 : index
    %c0_20 = arith.constant 0 : index
    %58 = vector.load %arg3[%c0_19, %c0_20] : memref<128x512xf32, #tpu.memory_space<vmem>>, vector<128x512xf32>
    %cst_21 = arith.constant dense<0.000000e+00> : vector<1x512xf32>
    %59 = tpu.matmul %51, %58, %cst_21 {dimension_numbers = #tpu.dot_dimension_numbers<[1], [0], [0], [1], [0, 0, 1, 1], [], []>} : vector<1x128xf32>, vector<128x512xf32>, vector<1x512xf32> -> vector<1x512xf32>
    %60 = arith.addf %57, %59 : vector<1x512xf32>
    %c0_22 = arith.constant 0 : index
    %c0_23 = arith.constant 0 : index
    %61 = vector.load %arg4[%c0_22, %c0_23] : memref<128x128xf32, #tpu.memory_space<vmem>>, vector<128x128xf32>
    %cst_24 = arith.constant dense<0.000000e+00> : vector<1x128xf32>
    %62 = tpu.matmul %49, %61, %cst_24 {dimension_numbers = #tpu.dot_dimension_numbers<[1], [0], [0], [1], [0, 0, 1, 1], [], []>} : vector<1x128xf32>, vector<128x128xf32>, vector<1x128xf32> -> vector<1x128xf32>
    %63 = arith.addf %3, %62 : vector<1x128xf32>
    %64 = math.tanh %63 : vector<1x128xf32>
    %65 = arith.subf %49, %64 : vector<1x128xf32>
    %66 = vector.broadcast %56 : f32 to vector<1x128xf32>
    %67 = arith.mulf %64, %66 : vector<1x128xf32>
    %68 = arith.addf %65, %67 : vector<1x128xf32>
    %69 = vector.extract_strided_slice %60 {offsets = [0, 0], sizes = [1, 128], strides = [1, 1]} : vector<1x512xf32> to vector<1x128xf32>
    %70 = arith.negf %69 : vector<1x128xf32>
    %71 = math.exp %70 : vector<1x128xf32>
    %cst_25 = arith.constant 1.000000e+00 : f32
    %72 = vector.broadcast %cst_25 : f32 to vector<1x128xf32>
    %73 = arith.addf %72, %71 : vector<1x128xf32>
    %74 = arith.divf %72, %73 : vector<1x128xf32>
    %75 = vector.extract_strided_slice %60 {offsets = [0, 128], sizes = [1, 128], strides = [1, 1]} : vector<1x512xf32> to vector<1x128xf32>
    %76 = arith.negf %75 : vector<1x128xf32>
    %77 = math.exp %76 : vector<1x128xf32>
    %cst_26 = arith.constant 1.000000e+00 : f32
    %78 = vector.broadcast %cst_26 : f32 to vector<1x128xf32>
    %79 = arith.addf %78, %77 : vector<1x128xf32>
    %80 = arith.divf %78, %79 : vector<1x128xf32>
    %81 = vector.extract_strided_slice %60 {offsets = [0, 256], sizes = [1, 128], strides = [1, 1]} : vector<1x512xf32> to vector<1x128xf32>
    %82 = arith.negf %81 : vector<1x128xf32>
    %83 = math.exp %82 : vector<1x128xf32>
    %cst_27 = arith.constant 1.000000e+00 : f32
    %84 = vector.broadcast %cst_27 : f32 to vector<1x128xf32>
    %85 = arith.addf %84, %83 : vector<1x128xf32>
    %86 = arith.divf %84, %85 : vector<1x128xf32>
    %87 = vector.extract_strided_slice %60 {offsets = [0, 384], sizes = [1, 128], strides = [1, 1]} : vector<1x512xf32> to vector<1x128xf32>
    %88 = math.tanh %87 : vector<1x128xf32>
    %89 = arith.mulf %80, %68 : vector<1x128xf32>
    %90 = arith.mulf %74, %88 : vector<1x128xf32>
    %91 = arith.addf %89, %90 : vector<1x128xf32>
    %92 = math.tanh %49 : vector<1x128xf32>
    %93 = arith.mulf %86, %92 : vector<1x128xf32>
    %c8_i32_28 = arith.constant 8 : i32
    %94 = arith.muli %arg0, %c8_i32_28 : i32
    %95 = arith.addi %94, %7 : i32
    %c2_i32 = arith.constant 2 : i32
    %96 = arith.addi %95, %c2_i32 : i32
    %97 = arith.index_cast %96 : i32 to index
    %98 = memref.load %arg1[%97] : memref<8xf32, #tpu.memory_space<smem>>
    %99 = vector.extract_strided_slice %9 {offsets = [2, 0], sizes = [1, 512], strides = [1, 1]} : vector<8x512xf32> to vector<1x512xf32>
    %c0_29 = arith.constant 0 : index
    %c0_30 = arith.constant 0 : index
    %100 = vector.load %arg3[%c0_29, %c0_30] : memref<128x512xf32, #tpu.memory_space<vmem>>, vector<128x512xf32>
    %cst_31 = arith.constant dense<0.000000e+00> : vector<1x512xf32>
    %101 = tpu.matmul %93, %100, %cst_31 {dimension_numbers = #tpu.dot_dimension_numbers<[1], [0], [0], [1], [0, 0, 1, 1], [], []>} : vector<1x128xf32>, vector<128x512xf32>, vector<1x512xf32> -> vector<1x512xf32>
    %102 = arith.addf %99, %101 : vector<1x512xf32>
    %c0_32 = arith.constant 0 : index
    %c0_33 = arith.constant 0 : index
    %103 = vector.load %arg4[%c0_32, %c0_33] : memref<128x128xf32, #tpu.memory_space<vmem>>, vector<128x128xf32>
    %cst_34 = arith.constant dense<0.000000e+00> : vector<1x128xf32>
    %104 = tpu.matmul %91, %103, %cst_34 {dimension_numbers = #tpu.dot_dimension_numbers<[1], [0], [0], [1], [0, 0, 1, 1], [], []>} : vector<1x128xf32>, vector<128x128xf32>, vector<1x128xf32> -> vector<1x128xf32>
    %105 = arith.addf %3, %104 : vector<1x128xf32>
    %106 = math.tanh %105 : vector<1x128xf32>
    %107 = arith.subf %91, %106 : vector<1x128xf32>
    %108 = vector.broadcast %98 : f32 to vector<1x128xf32>
    %109 = arith.mulf %106, %108 : vector<1x128xf32>
    %110 = arith.addf %107, %109 : vector<1x128xf32>
    %111 = vector.extract_strided_slice %102 {offsets = [0, 0], sizes = [1, 128], strides = [1, 1]} : vector<1x512xf32> to vector<1x128xf32>
    %112 = arith.negf %111 : vector<1x128xf32>
    %113 = math.exp %112 : vector<1x128xf32>
    %cst_35 = arith.constant 1.000000e+00 : f32
    %114 = vector.broadcast %cst_35 : f32 to vector<1x128xf32>
    %115 = arith.addf %114, %113 : vector<1x128xf32>
    %116 = arith.divf %114, %115 : vector<1x128xf32>
    %117 = vector.extract_strided_slice %102 {offsets = [0, 128], sizes = [1, 128], strides = [1, 1]} : vector<1x512xf32> to vector<1x128xf32>
    %118 = arith.negf %117 : vector<1x128xf32>
    %119 = math.exp %118 : vector<1x128xf32>
    %cst_36 = arith.constant 1.000000e+00 : f32
    %120 = vector.broadcast %cst_36 : f32 to vector<1x128xf32>
    %121 = arith.addf %120, %119 : vector<1x128xf32>
    %122 = arith.divf %120, %121 : vector<1x128xf32>
    %123 = vector.extract_strided_slice %102 {offsets = [0, 256], sizes = [1, 128], strides = [1, 1]} : vector<1x512xf32> to vector<1x128xf32>
    %124 = arith.negf %123 : vector<1x128xf32>
    %125 = math.exp %124 : vector<1x128xf32>
    %cst_37 = arith.constant 1.000000e+00 : f32
    %126 = vector.broadcast %cst_37 : f32 to vector<1x128xf32>
    %127 = arith.addf %126, %125 : vector<1x128xf32>
    %128 = arith.divf %126, %127 : vector<1x128xf32>
    %129 = vector.extract_strided_slice %102 {offsets = [0, 384], sizes = [1, 128], strides = [1, 1]} : vector<1x512xf32> to vector<1x128xf32>
    %130 = math.tanh %129 : vector<1x128xf32>
    %131 = arith.mulf %122, %110 : vector<1x128xf32>
    %132 = arith.mulf %116, %130 : vector<1x128xf32>
    %133 = arith.addf %131, %132 : vector<1x128xf32>
    %134 = math.tanh %91 : vector<1x128xf32>
    %135 = arith.mulf %128, %134 : vector<1x128xf32>
    %c8_i32_38 = arith.constant 8 : i32
    %136 = arith.muli %arg0, %c8_i32_38 : i32
    %137 = arith.addi %136, %7 : i32
    %c3_i32 = arith.constant 3 : i32
    %138 = arith.addi %137, %c3_i32 : i32
    %139 = arith.index_cast %138 : i32 to index
    %140 = memref.load %arg1[%139] : memref<8xf32, #tpu.memory_space<smem>>
    %141 = vector.extract_strided_slice %9 {offsets = [3, 0], sizes = [1, 512], strides = [1, 1]} : vector<8x512xf32> to vector<1x512xf32>
    %c0_39 = arith.constant 0 : index
    %c0_40 = arith.constant 0 : index
    %142 = vector.load %arg3[%c0_39, %c0_40] : memref<128x512xf32, #tpu.memory_space<vmem>>, vector<128x512xf32>
    %cst_41 = arith.constant dense<0.000000e+00> : vector<1x512xf32>
    %143 = tpu.matmul %135, %142, %cst_41 {dimension_numbers = #tpu.dot_dimension_numbers<[1], [0], [0], [1], [0, 0, 1, 1], [], []>} : vector<1x128xf32>, vector<128x512xf32>, vector<1x512xf32> -> vector<1x512xf32>
    %144 = arith.addf %141, %143 : vector<1x512xf32>
    %c0_42 = arith.constant 0 : index
    %c0_43 = arith.constant 0 : index
    %145 = vector.load %arg4[%c0_42, %c0_43] : memref<128x128xf32, #tpu.memory_space<vmem>>, vector<128x128xf32>
    %cst_44 = arith.constant dense<0.000000e+00> : vector<1x128xf32>
    %146 = tpu.matmul %133, %145, %cst_44 {dimension_numbers = #tpu.dot_dimension_numbers<[1], [0], [0], [1], [0, 0, 1, 1], [], []>} : vector<1x128xf32>, vector<128x128xf32>, vector<1x128xf32> -> vector<1x128xf32>
    %147 = arith.addf %3, %146 : vector<1x128xf32>
    %148 = math.tanh %147 : vector<1x128xf32>
    %149 = arith.subf %133, %148 : vector<1x128xf32>
    %150 = vector.broadcast %140 : f32 to vector<1x128xf32>
    %151 = arith.mulf %148, %150 : vector<1x128xf32>
    %152 = arith.addf %149, %151 : vector<1x128xf32>
    %153 = vector.extract_strided_slice %144 {offsets = [0, 0], sizes = [1, 128], strides = [1, 1]} : vector<1x512xf32> to vector<1x128xf32>
    %154 = arith.negf %153 : vector<1x128xf32>
    %155 = math.exp %154 : vector<1x128xf32>
    %cst_45 = arith.constant 1.000000e+00 : f32
    %156 = vector.broadcast %cst_45 : f32 to vector<1x128xf32>
    %157 = arith.addf %156, %155 : vector<1x128xf32>
    %158 = arith.divf %156, %157 : vector<1x128xf32>
    %159 = vector.extract_strided_slice %144 {offsets = [0, 128], sizes = [1, 128], strides = [1, 1]} : vector<1x512xf32> to vector<1x128xf32>
    %160 = arith.negf %159 : vector<1x128xf32>
    %161 = math.exp %160 : vector<1x128xf32>
    %cst_46 = arith.constant 1.000000e+00 : f32
    %162 = vector.broadcast %cst_46 : f32 to vector<1x128xf32>
    %163 = arith.addf %162, %161 : vector<1x128xf32>
    %164 = arith.divf %162, %163 : vector<1x128xf32>
    %165 = vector.extract_strided_slice %144 {offsets = [0, 256], sizes = [1, 128], strides = [1, 1]} : vector<1x512xf32> to vector<1x128xf32>
    %166 = arith.negf %165 : vector<1x128xf32>
    %167 = math.exp %166 : vector<1x128xf32>
    %cst_47 = arith.constant 1.000000e+00 : f32
    %168 = vector.broadcast %cst_47 : f32 to vector<1x128xf32>
    %169 = arith.addf %168, %167 : vector<1x128xf32>
    %170 = arith.divf %168, %169 : vector<1x128xf32>
    %171 = vector.extract_strided_slice %144 {offsets = [0, 384], sizes = [1, 128], strides = [1, 1]} : vector<1x512xf32> to vector<1x128xf32>
    %172 = math.tanh %171 : vector<1x128xf32>
    %173 = arith.mulf %164, %152 : vector<1x128xf32>
    %174 = arith.mulf %158, %172 : vector<1x128xf32>
    %175 = arith.addf %173, %174 : vector<1x128xf32>
    %176 = math.tanh %133 : vector<1x128xf32>
    %177 = arith.mulf %170, %176 : vector<1x128xf32>
    %c8_i32_48 = arith.constant 8 : i32
    %178 = arith.muli %arg0, %c8_i32_48 : i32
    %179 = arith.addi %178, %7 : i32
    %c4_i32 = arith.constant 4 : i32
    %180 = arith.addi %179, %c4_i32 : i32
    %181 = arith.index_cast %180 : i32 to index
    %182 = memref.load %arg1[%181] : memref<8xf32, #tpu.memory_space<smem>>
    %183 = vector.extract_strided_slice %9 {offsets = [4, 0], sizes = [1, 512], strides = [1, 1]} : vector<8x512xf32> to vector<1x512xf32>
    %c0_49 = arith.constant 0 : index
    %c0_50 = arith.constant 0 : index
    %184 = vector.load %arg3[%c0_49, %c0_50] : memref<128x512xf32, #tpu.memory_space<vmem>>, vector<128x512xf32>
    %cst_51 = arith.constant dense<0.000000e+00> : vector<1x512xf32>
    %185 = tpu.matmul %177, %184, %cst_51 {dimension_numbers = #tpu.dot_dimension_numbers<[1], [0], [0], [1], [0, 0, 1, 1], [], []>} : vector<1x128xf32>, vector<128x512xf32>, vector<1x512xf32> -> vector<1x512xf32>
    %186 = arith.addf %183, %185 : vector<1x512xf32>
    %c0_52 = arith.constant 0 : index
    %c0_53 = arith.constant 0 : index
    %187 = vector.load %arg4[%c0_52, %c0_53] : memref<128x128xf32, #tpu.memory_space<vmem>>, vector<128x128xf32>
    %cst_54 = arith.constant dense<0.000000e+00> : vector<1x128xf32>
    %188 = tpu.matmul %175, %187, %cst_54 {dimension_numbers = #tpu.dot_dimension_numbers<[1], [0], [0], [1], [0, 0, 1, 1], [], []>} : vector<1x128xf32>, vector<128x128xf32>, vector<1x128xf32> -> vector<1x128xf32>
    %189 = arith.addf %3, %188 : vector<1x128xf32>
    %190 = math.tanh %189 : vector<1x128xf32>
    %191 = arith.subf %175, %190 : vector<1x128xf32>
    %192 = vector.broadcast %182 : f32 to vector<1x128xf32>
    %193 = arith.mulf %190, %192 : vector<1x128xf32>
    %194 = arith.addf %191, %193 : vector<1x128xf32>
    %195 = vector.extract_strided_slice %186 {offsets = [0, 0], sizes = [1, 128], strides = [1, 1]} : vector<1x512xf32> to vector<1x128xf32>
    %196 = arith.negf %195 : vector<1x128xf32>
    %197 = math.exp %196 : vector<1x128xf32>
    %cst_55 = arith.constant 1.000000e+00 : f32
    %198 = vector.broadcast %cst_55 : f32 to vector<1x128xf32>
    %199 = arith.addf %198, %197 : vector<1x128xf32>
    %200 = arith.divf %198, %199 : vector<1x128xf32>
    %201 = vector.extract_strided_slice %186 {offsets = [0, 128], sizes = [1, 128], strides = [1, 1]} : vector<1x512xf32> to vector<1x128xf32>
    %202 = arith.negf %201 : vector<1x128xf32>
    %203 = math.exp %202 : vector<1x128xf32>
    %cst_56 = arith.constant 1.000000e+00 : f32
    %204 = vector.broadcast %cst_56 : f32 to vector<1x128xf32>
    %205 = arith.addf %204, %203 : vector<1x128xf32>
    %206 = arith.divf %204, %205 : vector<1x128xf32>
    %207 = vector.extract_strided_slice %186 {offsets = [0, 256], sizes = [1, 128], strides = [1, 1]} : vector<1x512xf32> to vector<1x128xf32>
    %208 = arith.negf %207 : vector<1x128xf32>
    %209 = math.exp %208 : vector<1x128xf32>
    %cst_57 = arith.constant 1.000000e+00 : f32
    %210 = vector.broadcast %cst_57 : f32 to vector<1x128xf32>
    %211 = arith.addf %210, %209 : vector<1x128xf32>
    %212 = arith.divf %210, %211 : vector<1x128xf32>
    %213 = vector.extract_strided_slice %186 {offsets = [0, 384], sizes = [1, 128], strides = [1, 1]} : vector<1x512xf32> to vector<1x128xf32>
    %214 = math.tanh %213 : vector<1x128xf32>
    %215 = arith.mulf %206, %194 : vector<1x128xf32>
    %216 = arith.mulf %200, %214 : vector<1x128xf32>
    %217 = arith.addf %215, %216 : vector<1x128xf32>
    %218 = math.tanh %175 : vector<1x128xf32>
    %219 = arith.mulf %212, %218 : vector<1x128xf32>
    %c8_i32_58 = arith.constant 8 : i32
    %220 = arith.muli %arg0, %c8_i32_58 : i32
    %221 = arith.addi %220, %7 : i32
    %c5_i32 = arith.constant 5 : i32
    %222 = arith.addi %221, %c5_i32 : i32
    %223 = arith.index_cast %222 : i32 to index
    %224 = memref.load %arg1[%223] : memref<8xf32, #tpu.memory_space<smem>>
    %225 = vector.extract_strided_slice %9 {offsets = [5, 0], sizes = [1, 512], strides = [1, 1]} : vector<8x512xf32> to vector<1x512xf32>
    %c0_59 = arith.constant 0 : index
    %c0_60 = arith.constant 0 : index
    %226 = vector.load %arg3[%c0_59, %c0_60] : memref<128x512xf32, #tpu.memory_space<vmem>>, vector<128x512xf32>
    %cst_61 = arith.constant dense<0.000000e+00> : vector<1x512xf32>
    %227 = tpu.matmul %219, %226, %cst_61 {dimension_numbers = #tpu.dot_dimension_numbers<[1], [0], [0], [1], [0, 0, 1, 1], [], []>} : vector<1x128xf32>, vector<128x512xf32>, vector<1x512xf32> -> vector<1x512xf32>
    %228 = arith.addf %225, %227 : vector<1x512xf32>
    %c0_62 = arith.constant 0 : index
    %c0_63 = arith.constant 0 : index
    %229 = vector.load %arg4[%c0_62, %c0_63] : memref<128x128xf32, #tpu.memory_space<vmem>>, vector<128x128xf32>
    %cst_64 = arith.constant dense<0.000000e+00> : vector<1x128xf32>
    %230 = tpu.matmul %217, %229, %cst_64 {dimension_numbers = #tpu.dot_dimension_numbers<[1], [0], [0], [1], [0, 0, 1, 1], [], []>} : vector<1x128xf32>, vector<128x128xf32>, vector<1x128xf32> -> vector<1x128xf32>
    %231 = arith.addf %3, %230 : vector<1x128xf32>
    %232 = math.tanh %231 : vector<1x128xf32>
    %233 = arith.subf %217, %232 : vector<1x128xf32>
    %234 = vector.broadcast %224 : f32 to vector<1x128xf32>
    %235 = arith.mulf %232, %234 : vector<1x128xf32>
    %236 = arith.addf %233, %235 : vector<1x128xf32>
    %237 = vector.extract_strided_slice %228 {offsets = [0, 0], sizes = [1, 128], strides = [1, 1]} : vector<1x512xf32> to vector<1x128xf32>
    %238 = arith.negf %237 : vector<1x128xf32>
    %239 = math.exp %238 : vector<1x128xf32>
    %cst_65 = arith.constant 1.000000e+00 : f32
    %240 = vector.broadcast %cst_65 : f32 to vector<1x128xf32>
    %241 = arith.addf %240, %239 : vector<1x128xf32>
    %242 = arith.divf %240, %241 : vector<1x128xf32>
    %243 = vector.extract_strided_slice %228 {offsets = [0, 128], sizes = [1, 128], strides = [1, 1]} : vector<1x512xf32> to vector<1x128xf32>
    %244 = arith.negf %243 : vector<1x128xf32>
    %245 = math.exp %244 : vector<1x128xf32>
    %cst_66 = arith.constant 1.000000e+00 : f32
    %246 = vector.broadcast %cst_66 : f32 to vector<1x128xf32>
    %247 = arith.addf %246, %245 : vector<1x128xf32>
    %248 = arith.divf %246, %247 : vector<1x128xf32>
    %249 = vector.extract_strided_slice %228 {offsets = [0, 256], sizes = [1, 128], strides = [1, 1]} : vector<1x512xf32> to vector<1x128xf32>
    %250 = arith.negf %249 : vector<1x128xf32>
    %251 = math.exp %250 : vector<1x128xf32>
    %cst_67 = arith.constant 1.000000e+00 : f32
    %252 = vector.broadcast %cst_67 : f32 to vector<1x128xf32>
    %253 = arith.addf %252, %251 : vector<1x128xf32>
    %254 = arith.divf %252, %253 : vector<1x128xf32>
    %255 = vector.extract_strided_slice %228 {offsets = [0, 384], sizes = [1, 128], strides = [1, 1]} : vector<1x512xf32> to vector<1x128xf32>
    %256 = math.tanh %255 : vector<1x128xf32>
    %257 = arith.mulf %248, %236 : vector<1x128xf32>
    %258 = arith.mulf %242, %256 : vector<1x128xf32>
    %259 = arith.addf %257, %258 : vector<1x128xf32>
    %260 = math.tanh %217 : vector<1x128xf32>
    %261 = arith.mulf %254, %260 : vector<1x128xf32>
    %c8_i32_68 = arith.constant 8 : i32
    %262 = arith.muli %arg0, %c8_i32_68 : i32
    %263 = arith.addi %262, %7 : i32
    %c6_i32 = arith.constant 6 : i32
    %264 = arith.addi %263, %c6_i32 : i32
    %265 = arith.index_cast %264 : i32 to index
    %266 = memref.load %arg1[%265] : memref<8xf32, #tpu.memory_space<smem>>
    %267 = vector.extract_strided_slice %9 {offsets = [6, 0], sizes = [1, 512], strides = [1, 1]} : vector<8x512xf32> to vector<1x512xf32>
    %c0_69 = arith.constant 0 : index
    %c0_70 = arith.constant 0 : index
    %268 = vector.load %arg3[%c0_69, %c0_70] : memref<128x512xf32, #tpu.memory_space<vmem>>, vector<128x512xf32>
    %cst_71 = arith.constant dense<0.000000e+00> : vector<1x512xf32>
    %269 = tpu.matmul %261, %268, %cst_71 {dimension_numbers = #tpu.dot_dimension_numbers<[1], [0], [0], [1], [0, 0, 1, 1], [], []>} : vector<1x128xf32>, vector<128x512xf32>, vector<1x512xf32> -> vector<1x512xf32>
    %270 = arith.addf %267, %269 : vector<1x512xf32>
    %c0_72 = arith.constant 0 : index
    %c0_73 = arith.constant 0 : index
    %271 = vector.load %arg4[%c0_72, %c0_73] : memref<128x128xf32, #tpu.memory_space<vmem>>, vector<128x128xf32>
    %cst_74 = arith.constant dense<0.000000e+00> : vector<1x128xf32>
    %272 = tpu.matmul %259, %271, %cst_74 {dimension_numbers = #tpu.dot_dimension_numbers<[1], [0], [0], [1], [0, 0, 1, 1], [], []>} : vector<1x128xf32>, vector<128x128xf32>, vector<1x128xf32> -> vector<1x128xf32>
    %273 = arith.addf %3, %272 : vector<1x128xf32>
    %274 = math.tanh %273 : vector<1x128xf32>
    %275 = arith.subf %259, %274 : vector<1x128xf32>
    %276 = vector.broadcast %266 : f32 to vector<1x128xf32>
    %277 = arith.mulf %274, %276 : vector<1x128xf32>
    %278 = arith.addf %275, %277 : vector<1x128xf32>
    %279 = vector.extract_strided_slice %270 {offsets = [0, 0], sizes = [1, 128], strides = [1, 1]} : vector<1x512xf32> to vector<1x128xf32>
    %280 = arith.negf %279 : vector<1x128xf32>
    %281 = math.exp %280 : vector<1x128xf32>
    %cst_75 = arith.constant 1.000000e+00 : f32
    %282 = vector.broadcast %cst_75 : f32 to vector<1x128xf32>
    %283 = arith.addf %282, %281 : vector<1x128xf32>
    %284 = arith.divf %282, %283 : vector<1x128xf32>
    %285 = vector.extract_strided_slice %270 {offsets = [0, 128], sizes = [1, 128], strides = [1, 1]} : vector<1x512xf32> to vector<1x128xf32>
    %286 = arith.negf %285 : vector<1x128xf32>
    %287 = math.exp %286 : vector<1x128xf32>
    %cst_76 = arith.constant 1.000000e+00 : f32
    %288 = vector.broadcast %cst_76 : f32 to vector<1x128xf32>
    %289 = arith.addf %288, %287 : vector<1x128xf32>
    %290 = arith.divf %288, %289 : vector<1x128xf32>
    %291 = vector.extract_strided_slice %270 {offsets = [0, 256], sizes = [1, 128], strides = [1, 1]} : vector<1x512xf32> to vector<1x128xf32>
    %292 = arith.negf %291 : vector<1x128xf32>
    %293 = math.exp %292 : vector<1x128xf32>
    %cst_77 = arith.constant 1.000000e+00 : f32
    %294 = vector.broadcast %cst_77 : f32 to vector<1x128xf32>
    %295 = arith.addf %294, %293 : vector<1x128xf32>
    %296 = arith.divf %294, %295 : vector<1x128xf32>
    %297 = vector.extract_strided_slice %270 {offsets = [0, 384], sizes = [1, 128], strides = [1, 1]} : vector<1x512xf32> to vector<1x128xf32>
    %298 = math.tanh %297 : vector<1x128xf32>
    %299 = arith.mulf %290, %278 : vector<1x128xf32>
    %300 = arith.mulf %284, %298 : vector<1x128xf32>
    %301 = arith.addf %299, %300 : vector<1x128xf32>
    %302 = math.tanh %259 : vector<1x128xf32>
    %303 = arith.mulf %296, %302 : vector<1x128xf32>
    %c8_i32_78 = arith.constant 8 : i32
    %304 = arith.muli %arg0, %c8_i32_78 : i32
    %305 = arith.addi %304, %7 : i32
    %c7_i32 = arith.constant 7 : i32
    %306 = arith.addi %305, %c7_i32 : i32
    %307 = arith.index_cast %306 : i32 to index
    %308 = memref.load %arg1[%307] : memref<8xf32, #tpu.memory_space<smem>>
    %309 = vector.extract_strided_slice %9 {offsets = [7, 0], sizes = [1, 512], strides = [1, 1]} : vector<8x512xf32> to vector<1x512xf32>
    %c0_79 = arith.constant 0 : index
    %c0_80 = arith.constant 0 : index
    %310 = vector.load %arg3[%c0_79, %c0_80] : memref<128x512xf32, #tpu.memory_space<vmem>>, vector<128x512xf32>
    %cst_81 = arith.constant dense<0.000000e+00> : vector<1x512xf32>
    %311 = tpu.matmul %303, %310, %cst_81 {dimension_numbers = #tpu.dot_dimension_numbers<[1], [0], [0], [1], [0, 0, 1, 1], [], []>} : vector<1x128xf32>, vector<128x512xf32>, vector<1x512xf32> -> vector<1x512xf32>
    %312 = arith.addf %309, %311 : vector<1x512xf32>
    %c0_82 = arith.constant 0 : index
    %c0_83 = arith.constant 0 : index
    %313 = vector.load %arg4[%c0_82, %c0_83] : memref<128x128xf32, #tpu.memory_space<vmem>>, vector<128x128xf32>
    %cst_84 = arith.constant dense<0.000000e+00> : vector<1x128xf32>
    %314 = tpu.matmul %301, %313, %cst_84 {dimension_numbers = #tpu.dot_dimension_numbers<[1], [0], [0], [1], [0, 0, 1, 1], [], []>} : vector<1x128xf32>, vector<128x128xf32>, vector<1x128xf32> -> vector<1x128xf32>
    %315 = arith.addf %3, %314 : vector<1x128xf32>
    %316 = math.tanh %315 : vector<1x128xf32>
    %317 = arith.subf %301, %316 : vector<1x128xf32>
    %318 = vector.broadcast %308 : f32 to vector<1x128xf32>
    %319 = arith.mulf %316, %318 : vector<1x128xf32>
    %320 = arith.addf %317, %319 : vector<1x128xf32>
    %321 = vector.extract_strided_slice %312 {offsets = [0, 0], sizes = [1, 128], strides = [1, 1]} : vector<1x512xf32> to vector<1x128xf32>
    %322 = arith.negf %321 : vector<1x128xf32>
    %323 = math.exp %322 : vector<1x128xf32>
    %cst_85 = arith.constant 1.000000e+00 : f32
    %324 = vector.broadcast %cst_85 : f32 to vector<1x128xf32>
    %325 = arith.addf %324, %323 : vector<1x128xf32>
    %326 = arith.divf %324, %325 : vector<1x128xf32>
    %327 = vector.extract_strided_slice %312 {offsets = [0, 128], sizes = [1, 128], strides = [1, 1]} : vector<1x512xf32> to vector<1x128xf32>
    %328 = arith.negf %327 : vector<1x128xf32>
    %329 = math.exp %328 : vector<1x128xf32>
    %cst_86 = arith.constant 1.000000e+00 : f32
    %330 = vector.broadcast %cst_86 : f32 to vector<1x128xf32>
    %331 = arith.addf %330, %329 : vector<1x128xf32>
    %332 = arith.divf %330, %331 : vector<1x128xf32>
    %333 = vector.extract_strided_slice %312 {offsets = [0, 256], sizes = [1, 128], strides = [1, 1]} : vector<1x512xf32> to vector<1x128xf32>
    %334 = arith.negf %333 : vector<1x128xf32>
    %335 = math.exp %334 : vector<1x128xf32>
    %cst_87 = arith.constant 1.000000e+00 : f32
    %336 = vector.broadcast %cst_87 : f32 to vector<1x128xf32>
    %337 = arith.addf %336, %335 : vector<1x128xf32>
    %338 = arith.divf %336, %337 : vector<1x128xf32>
    %339 = vector.extract_strided_slice %312 {offsets = [0, 384], sizes = [1, 128], strides = [1, 1]} : vector<1x512xf32> to vector<1x128xf32>
    %340 = math.tanh %339 : vector<1x128xf32>
    %341 = arith.mulf %332, %320 : vector<1x128xf32>
    %342 = arith.mulf %326, %340 : vector<1x128xf32>
    %343 = arith.addf %341, %342 : vector<1x128xf32>
    %344 = math.tanh %301 : vector<1x128xf32>
    %345 = arith.mulf %338, %344 : vector<1x128xf32>
    %346 = tpu.concatenate %51, %93, %135, %177, %219, %261, %303, %345 in 0 : vector<1x128xf32>, vector<1x128xf32>, vector<1x128xf32>, vector<1x128xf32>, vector<1x128xf32>, vector<1x128xf32>, vector<1x128xf32>, vector<1x128xf32> -> vector<8x128xf32>
    %347 = arith.index_cast %7 : i32 to index
    %c0_88 = arith.constant 0 : index
    %348 = vector.load %arg6[%347, %c0_88] : memref<8x128xf32, #tpu.memory_space<vmem>>, vector<8x128xf32>
    tpu.vector_store %arg6[%347, %c0_88], %346 {strides = array<i32>} : memref<8x128xf32, #tpu.memory_space<vmem>>, vector<8x128xf32>,
    %c1_i32_89 = arith.constant 1 : i32
    %c0_90 = arith.constant 0 : index
    %c0_91 = arith.constant 0 : index
    %349 = vector.load %arg7[%c0_90, %c0_91] : memref<1x128xf32, #tpu.memory_space<vmem>>, vector<1x128xf32>
    tpu.vector_store %arg7[%c0_90, %c0_91], %345 {strides = array<i32>} : memref<1x128xf32, #tpu.memory_space<vmem>>, vector<1x128xf32>,
    %c0_92 = arith.constant 0 : index
    %c0_93 = arith.constant 0 : index
    %350 = vector.load %arg8[%c0_92, %c0_93] : memref<1x128xf32, #tpu.memory_space<vmem>>, vector<1x128xf32>
    tpu.vector_store %arg8[%c0_92, %c0_93], %343 {strides = array<i32>} : memref<1x128xf32, #tpu.memory_space<vmem>>, vector<1x128xf32>,
    return
  }
  func.func @transform_0(%arg0: i32) -> i32 {
    %c0_i32 = arith.constant 0 : i32
    %c0_i32_0 = arith.constant 0 : i32
    return %c0_i32 : i32
  }
  func.func @transform_1(%arg0: i32) -> (i32, i32) {
    %c0_i32 = arith.constant 0 : i32
    %c0_i32_0 = arith.constant 0 : i32
    return %arg0, %c0_i32 : i32, i32
  }
  func.func @transform_2(%arg0: i32) -> (i32, i32) {
    %c0_i32 = arith.constant 0 : i32
    %c0_i32_0 = arith.constant 0 : i32
    %c0_i32_1 = arith.constant 0 : i32
    return %c0_i32, %c0_i32_0 : i32, i32
  }
  func.func @transform_3(%arg0: i32) -> (i32, i32) {
    %c0_i32 = arith.constant 0 : i32
    %c0_i32_0 = arith.constant 0 : i32
    %c0_i32_1 = arith.constant 0 : i32
    return %c0_i32, %c0_i32_0 : i32, i32
  }
  func.func @transform_4(%arg0: i32) -> (i32, i32) {
    %c0_i32 = arith.constant 0 : i32
    %c0_i32_0 = arith.constant 0 : i32
    %c0_i32_1 = arith.constant 0 : i32
    return %c0_i32, %c0_i32_0 : i32, i32
  }
  func.func @transform_5(%arg0: i32) -> (i32, i32) {
    %c0_i32 = arith.constant 0 : i32
    %c0_i32_0 = arith.constant 0 : i32
    return %arg0, %c0_i32 : i32, i32
  }
}

</mosaic_0001>

<llo_original>
// kernel: forward.1
$region0: #{forward.1}
  #allocation0 [shape = 'u32[]', space=smem, size = 0x4, offset = 0x4, fixed_abs, tag = 'smem constant byte address 0x4 - core index']
  #allocation1 [shape = 'u32[144,128]{1,0:T(1,128)}', space=vmem, size = 0x12000, scoped, tag = 'internal scratch']
  #allocation2 [shape = 'f32[1,128]{1,0:T(1,128)}', space=vmem, size = 0x200, scoped, tag = 'scratch operand']
  #allocation3 [shape = 'f32[1,128]{1,0:T(1,128)}', space=vmem, size = 0x200, scoped, tag = 'scratch operand']
  %s0 = inlined_call_operand.vmem [shape: f32[8], index: 0, kind: input, shape index: {}]
  %s1 = inlined_call_operand.vmem [shape: f32[8,512], index: 1, kind: input, shape index: {}]
  %s2 = inlined_call_operand.hbm [shape: f32[128,512], index: 2, kind: input, shape index: {}]
  %s3 = inlined_call_operand.hbm [shape: f32[128,128], index: 3, kind: input, shape index: {}]
  %s4 = inlined_call_operand.vmem [shape: f32[1,128], index: 4, kind: input, shape index: {}]
  %s5 = inlined_call_operand.hbm [shape: f32[8,128], index: 5, kind: output, shape index: {}]
  %s6 = sld [smem:[#allocation0]]
  $region46: #{forward.1} parent=0
    _
  %s8 = ssub.s32 1, %s6
  %s9 = scalar_select 0, %s8, %s6
  $region1: #{forward.1} parent=0
    #allocation4 [shape = 'u8[512]{0}', space=smem, size = 0x200, scoped, tag = 'input window, operand 0, single buffered']
    #allocation5 [shape = 's32[1]{0}', space=sflag, size = 0x4, scoped, tag = 'scoped memory for forward.1']
    #allocation6 [shape = 's32[1]{0}', space=sflag, size = 0x4, scoped, tag = 'scoped memory for forward.1']
    #allocation7 [shape = 's32[1]{0}', space=sflag, size = 0x4, scoped, tag = 'scoped memory for forward.1']
    #allocation8 [shape = 'u8[262144]{0}', space=vmem, size = 0x40000, scoped, tag = 'input window, operand 2, single buffered']
    #allocation9 [shape = 'u8[65536]{0}', space=vmem, size = 0x10000, scoped, tag = 'input window, operand 3, single buffered']
    #allocation10 [shape = 's32[1]{0}', space=sflag, size = 0x4, scoped, tag = 'scoped memory for forward.1']
    #allocation11 [shape = 'u8[4096]{0}', space=vmem, size = 0x1000, scoped, tag = 'output window, operand 0, single buffered']
    %10 = vsyncpa [#allocation7], 0
    %11 = vsyncpa [#allocation5], 0
    %12 = vsyncpa [#allocation10], 0
    %13 = vsyncpa [#allocation6], 0
    // Predicated region
    $region2: #{forward.1} parent=1 // pred_check
      _
    $region3: #{forward.1} parent=1 // pred_check_branch
      %15 = sbr.rel (0) target = $region5
    $region4: #{forward.1} parent=1 // pred_region
      %s17 = ssub.s32 16, 16
      %18 = vsyncadd [#allocation7], %s17
      %s20 = sshll.u32 %s0, 4
      %s21 = int_to_ptr.vmem [resolvable:$true] %s20
      %23 = dma.vmem_to_smem %s21, 16, [#allocation4], [#allocation7]
    $region5: #{forward.1} parent=1 // pred_fallthru
      _
    // Predicated region
    $region6: #{forward.1} parent=1 // pred_check
      _
    $region7: #{forward.1} parent=1 // pred_check_branch
      %25 = sbr.rel (0) target = $region9
    $region8: #{forward.1} parent=1 // pred_region
      _
    $region9: #{forward.1} parent=1 // pred_fallthru
      _
    // Predicated region
    $region10: #{forward.1} parent=1 // pred_check
      _
    $region11: #{forward.1} parent=1 // pred_check_branch
      %27 = sbr.rel (0) target = $region13
    $region12: #{forward.1} parent=1 // pred_region
      %s29 = ssub.s32 8192, 8192
      %30 = vsyncadd [#allocation5], %s29
      %s31 = sshll.u32 [#allocation8], 4
      %s32 = int_to_ptr.vmem [resolvable:$true] %s31
      %37 = dma.hbm_to_vmem [thread:$0]  %s2, 8192, %s32, [#allocation5], 512, 512, 32
    $region13: #{forward.1} parent=1 // pred_fallthru
      _
    // Predicated region
    $region14: #{forward.1} parent=1 // pred_check
      _
    $region15: #{forward.1} parent=1 // pred_check_branch
      %39 = sbr.rel (0) target = $region17
    $region16: #{forward.1} parent=1 // pred_region
      %s41 = ssub.s32 2048, 2048
      %42 = vsyncadd [#allocation10], %s41
      %s43 = sshll.u32 [#allocation9], 4
      %s44 = int_to_ptr.vmem [resolvable:$true] %s43
      %49 = dma.hbm_to_vmem [thread:$0]  %s3, 2048, %s44, [#allocation10], 128, 128, 8
    $region17: #{forward.1} parent=1 // pred_fallthru
      _
    // Predicated region
    $region18: #{forward.1} parent=1 // pred_check
      _
    $region19: #{forward.1} parent=1 // pred_check_branch
      %51 = sbr.rel (0) target = $region21
    $region20: #{forward.1} parent=1 // pred_region
      _
    $region21: #{forward.1} parent=1 // pred_fallthru
      _
    // Predicated region
    $region22: #{forward.1} parent=1 // pred_check
      _
    $region23: #{forward.1} parent=1 // pred_check_branch
      %53 = sbr.rel (0) target = $region25
    $region24: #{forward.1} parent=1 // pred_region
      %54 = dma.done [#allocation7], 16
    $region25: #{forward.1} parent=1 // pred_fallthru
      _
    // Predicated region
    $region26: #{forward.1} parent=1 // pred_check
      _
    $region27: #{forward.1} parent=1 // pred_check_branch
      %56 = sbr.rel (0) target = $region29
    $region28: #{forward.1} parent=1 // pred_region
      %57 = dma.done [#allocation5], 8192
    $region29: #{forward.1} parent=1 // pred_fallthru
      _
    // Predicated region
    $region30: #{forward.1} parent=1 // pred_check
      _
    $region31: #{forward.1} parent=1 // pred_check_branch
      %59 = sbr.rel (0) target = $region33
    $region32: #{forward.1} parent=1 // pred_region
      %60 = dma.done [#allocation10], 2048
    $region33: #{forward.1} parent=1 // pred_fallthru
      _
    %61 = sfence
    %p62 = scmp.eq.s32.totalorder 0, 0
    // Predicated region
    $region34: #{forward.1} parent=1 // pred_check
      %p63 = pneg %p62
    $region35: #{forward.1} parent=1 // pred_check_branch
      %65 = sbr.rel (%p63) target = $region37
    $region36: #{forward.1} parent=1 // pred_region
      %66 = vst [vmem:[#allocation2] sm:$0x1] 0.0
      %67 = vst [vmem:[#allocation3] sm:$0x1] 0.0
    $region37: #{forward.1} parent=1 // pred_fallthru
      _
    %v68 = vld [vmem:[%s4] sm:$0x1]
    %v69 = vld [vmem:[#allocation2] sm:$0x1]
    %v70 = vld [vmem:[#allocation3] sm:$0x1]
    %s71 = smul.u32 0, 4
    %s72 = smul.addr %s71, 8
    %s73 = scalar_lea.vmem %s1, %s72
    %v74 = vld [vmem:[%s73] sm:$0xff]
    %v75 = vld [vmem:[%s73 + $0x8] sm:$0xff]
    %v76 = vld [vmem:[%s73 + $0x10] sm:$0xff]
    %v77 = vld [vmem:[%s73 + $0x18] sm:$0xff]
    %s78 = smul.u32 0, 8
    %s79 = sadd.s32 %s78, 0
    %s80 = sld [smem:[#allocation4 + %s79]]
    %v81 = vld [vmem:[#allocation8] sm:$0xff]
    %v82 = vld [vmem:[#allocation8 + $0x8] sm:$0xff]
    %v83 = vld [vmem:[#allocation8 + $0x10] sm:$0xff]
    %v84 = vld [vmem:[#allocation8 + $0x18] sm:$0xff]
    %v85 = vld [vmem:[#allocation8 + $0x20] sm:$0xff]
    %v86 = vld [vmem:[#allocation8 + $0x28] sm:$0xff]
    %v87 = vld [vmem:[#allocation8 + $0x30] sm:$0xff]
    %v88 = vld [vmem:[#allocation8 + $0x38] sm:$0xff]
    %v89 = vld [vmem:[#allocation8 + $0x40] sm:$0xff]
    %v90 = vld [vmem:[#allocation8 + $0x48] sm:$0xff]
    %v91 = vld [vmem:[#allocation8 + $0x50] sm:$0xff]
    %v92 = vld [vmem:[#allocation8 + $0x58] sm:$0xff]
    %v93 = vld [vmem:[#allocation8 + $0x60] sm:$0xff]
    %v94 = vld [vmem:[#allocation8 + $0x68] sm:$0xff]
    %v95 = vld [vmem:[#allocation8 + $0x70] sm:$0xff]
    %v96 = vld [vmem:[#allocation8 + $0x78] sm:$0xff]
    %v97 = vld [vmem:[#allocation8 + $0x80] sm:$0xff]
    %v98 = vld [vmem:[#allocation8 + $0x88] sm:$0xff]
    %v99 = vld [vmem:[#allocation8 + $0x90] sm:$0xff]
    %v100 = vld [vmem:[#allocation8 + $0x98] sm:$0xff]
    %v101 = vld [vmem:[#allocation8 + $0xa0] sm:$0xff]
    %v102 = vld [vmem:[#allocation8 + $0xa8] sm:$0xff]
    %v103 = vld [vmem:[#allocation8 + $0xb0] sm:$0xff]
    %v104 = vld [vmem:[#allocation8 + $0xb8] sm:$0xff]
    %v105 = vld [vmem:[#allocation8 + $0xc0] sm:$0xff]
    %v106 = vld [vmem:[#allocation8 + $0xc8] sm:$0xff]
    %v107 = vld [vmem:[#allocation8 + $0xd0] sm:$0xff]
    %v108 = vld [vmem:[#allocation8 + $0xd8] sm:$0xff]
    %v109 = vld [vmem:[#allocation8 + $0xe0] sm:$0xff]
    %v110 = vld [vmem:[#allocation8 + $0xe8] sm:$0xff]
    %v111 = vld [vmem:[#allocation8 + $0xf0] sm:$0xff]
    %v112 = vld [vmem:[#allocation8 + $0xf8] sm:$0xff]
    %v113 = vld [vmem:[#allocation8 + $0x100] sm:$0xff]
    %v114 = vld [vmem:[#allocation8 + $0x108] sm:$0xff]
    %v115 = vld [vmem:[#allocation8 + $0x110] sm:$0xff]
    %v116 = vld [vmem:[#allocation8 + $0x118] sm:$0xff]
    %v117 = vld [vmem:[#allocation8 + $0x120] sm:$0xff]
    %v118 = vld [vmem:[#allocation8 + $0x128] sm:$0xff]
    %v119 = vld [vmem:[#allocation8 + $0x130] sm:$0xff]
    %v120 = vld [vmem:[#allocation8 + $0x138] sm:$0xff]
    %v121 = vld [vmem:[#allocation8 + $0x140] sm:$0xff]
    %v122 = vld [vmem:[#allocation8 + $0x148] sm:$0xff]
    %v123 = vld [vmem:[#allocation8 + $0x150] sm:$0xff]
    %v124 = vld [vmem:[#allocation8 + $0x158] sm:$0xff]
    %v125 = vld [vmem:[#allocation8 + $0x160] sm:$0xff]
    %v126 = vld [vmem:[#allocation8 + $0x168] sm:$0xff]
    %v127 = vld [vmem:[#allocation8 + $0x170] sm:$0xff]
    %v128 = vld [vmem:[#allocation8 + $0x178] sm:$0xff]
    %v129 = vld [vmem:[#allocation8 + $0x180] sm:$0xff]
    %v130 = vld [vmem:[#allocation8 + $0x188] sm:$0xff]
    %v131 = vld [vmem:[#allocation8 + $0x190] sm:$0xff]
    %v132 = vld [vmem:[#allocation8 + $0x198] sm:$0xff]
    %v133 = vld [vmem:[#allocation8 + $0x1a0] sm:$0xff]
    %v134 = vld [vmem:[#allocation8 + $0x1a8] sm:$0xff]
    %v135 = vld [vmem:[#allocation8 + $0x1b0] sm:$0xff]
    %v136 = vld [vmem:[#allocation8 + $0x1b8] sm:$0xff]
    %v137 = vld [vmem:[#allocation8 + $0x1c0] sm:$0xff]
    %v138 = vld [vmem:[#allocation8 + $0x1c8] sm:$0xff]
    %v139 = vld [vmem:[#allocation8 + $0x1d0] sm:$0xff]
    %v140 = vld [vmem:[#allocation8 + $0x1d8] sm:$0xff]
    %v141 = vld [vmem:[#allocation8 + $0x1e0] sm:$0xff]
    %v142 = vld [vmem:[#allocation8 + $0x1e8] sm:$0xff]
    %v143 = vld [vmem:[#allocation8 + $0x1f0] sm:$0xff]
    %v144 = vld [vmem:[#allocation8 + $0x1f8] sm:$0xff]
    %145 = vmatprep.subr.mxu0 %v82
    %146 = vmatpush1.msra.mxu0 %v81
    %147 = vmatprep.subr.mxu0 %v86
    %148 = vmatpush1.msra.mxu0 %v85
    %149 = vmatprep.subr.mxu0 %v90
    %150 = vmatpush1.msra.mxu0 %v89
    %151 = vmatprep.subr.mxu0 %v94
    %152 = vmatpush1.msra.mxu0 %v93
    %153 = vmatprep.subr.mxu0 %v98
    %154 = vmatpush1.msra.mxu0 %v97
    %155 = vmatprep.subr.mxu0 %v102
    %156 = vmatpush1.msra.mxu0 %v101
    %157 = vmatprep.subr.mxu0 %v106
    %158 = vmatpush1.msra.mxu0 %v105
    %159 = vmatprep.subr.mxu0 %v110
    %160 = vmatpush1.msra.mxu0 %v109
    %161 = vmatprep.subr.mxu0 %v114
    %162 = vmatpush1.msra.mxu0 %v113
    %163 = vmatprep.subr.mxu0 %v118
    %164 = vmatpush1.msra.mxu0 %v117
    %165 = vmatprep.subr.mxu0 %v122
    %166 = vmatpush1.msra.mxu0 %v121
    %167 = vmatprep.subr.mxu0 %v126
    %168 = vmatpush1.msra.mxu0 %v125
    %169 = vmatprep.subr.mxu0 %v130
    %170 = vmatpush1.msra.mxu0 %v129
    %171 = vmatprep.subr.mxu0 %v134
    %172 = vmatpush1.msra.mxu0 %v133
    %173 = vmatprep.subr.mxu0 %v138
    %174 = vmatpush1.msra.mxu0 %v137
    %175 = vmatprep.subr.mxu0 %v142
    %176 = vmatpush1.msra.mxu0 %v141
    %177 = vmatprep.subr.mxu0 0.0
    %178 = vmatpush1.msra.mxu0 0.0
    %179 = vmatprep.subr.mxu0 0.0
    %180 = vmatpush1.msra.mxu0 0.0
    %181 = vmatprep.subr.mxu0 0.0
    %182 = vmatpush1.msra.mxu0 0.0
    %183 = vmatprep.subr.mxu0 0.0
    %184 = vmatpush1.msra.mxu0 0.0
    %185 = vmatprep.subr.mxu0 0.0
    %186 = vmatpush1.msra.mxu0 0.0
    %187 = vmatprep.subr.mxu0 0.0
    %188 = vmatpush1.msra.mxu0 0.0
    %189 = vmatprep.subr.mxu0 0.0
    %190 = vmatpush1.msra.mxu0 0.0
    %191 = vmatprep.subr.mxu0 0.0
    %192 = vmatpush1.msra.mxu0 0.0
    %193 = vmatprep.subr.mxu0 0.0
    %194 = vmatpush1.msra.mxu0 0.0
    %195 = vmatprep.subr.mxu0 0.0
    %196 = vmatpush1.msra.mxu0 0.0
    %197 = vmatprep.subr.mxu0 0.0
    %198 = vmatpush1.msra.mxu0 0.0
    %199 = vmatprep.subr.mxu0 0.0
    %200 = vmatpush1.msra.mxu0 0.0
    %201 = vmatprep.subr.mxu0 0.0
    %202 = vmatpush1.msra.mxu0 0.0
    %203 = vmatprep.subr.mxu0 0.0
    %204 = vmatpush1.msra.mxu0 0.0
    %205 = vmatprep.subr.mxu0 0.0
    %206 = vmatpush1.msra.mxu0 0.0
    %207 = vmatprep.subr.mxu0 0.0
    %208 = vmatpush1.msra.mxu0 0.0
    %209 = vmatprep.mubr.f32.mxu0 0.0
    %210 = vmatmul.mubr.f32.gmra.mrb[0].mxu0 %v69
    %v211 = vpop.f32.mrb[0].mxu0
    %v212 = vadd.f32 0.0, %v211
    %v213 = vpop.f32.mrb[0].mxu0
    %v214 = vadd.f32 0.0, %v213
    %215 = vdwg.mxu0
    %216 = vmatprep.subr.mxu0 %v84
    %217 = vmatpush1.msra.mxu0 %v83
    %218 = vmatprep.subr.mxu0 %v88
    %219 = vmatpush1.msra.mxu0 %v87
    %220 = vmatprep.subr.mxu0 %v92
    %221 = vmatpush1.msra.mxu0 %v91
    %222 = vmatprep.subr.mxu0 %v96
    %223 = vmatpush1.msra.mxu0 %v95
    %224 = vmatprep.subr.mxu0 %v100
    %225 = vmatpush1.msra.mxu0 %v99
    %226 = vmatprep.subr.mxu0 %v104
    %227 = vmatpush1.msra.mxu0 %v103
    %228 = vmatprep.subr.mxu0 %v108
    %229 = vmatpush1.msra.mxu0 %v107
    %230 = vmatprep.subr.mxu0 %v112
    %231 = vmatpush1.msra.mxu0 %v111
    %232 = vmatprep.subr.mxu0 %v116
    %233 = vmatpush1.msra.mxu0 %v115
    %234 = vmatprep.subr.mxu0 %v120
    %235 = vmatpush1.msra.mxu0 %v119
    %236 = vmatprep.subr.mxu0 %v124
    %237 = vmatpush1.msra.mxu0 %v123
    %238 = vmatprep.subr.mxu0 %v128
    %239 = vmatpush1.msra.mxu0 %v127
    %240 = vmatprep.subr.mxu0 %v132
    %241 = vmatpush1.msra.mxu0 %v131
    %242 = vmatprep.subr.mxu0 %v136
    %243 = vmatpush1.msra.mxu0 %v135
    %244 = vmatprep.subr.mxu0 %v140
    %245 = vmatpush1.msra.mxu0 %v139
    %246 = vmatprep.subr.mxu0 %v144
    %247 = vmatpush1.msra.mxu0 %v143
    %248 = vmatprep.subr.mxu0 0.0
    %249 = vmatpush1.msra.mxu0 0.0
    %250 = vmatprep.subr.mxu0 0.0
    %251 = vmatpush1.msra.mxu0 0.0
    %252 = vmatprep.subr.mxu0 0.0
    %253 = vmatpush1.msra.mxu0 0.0
    %254 = vmatprep.subr.mxu0 0.0
    %255 = vmatpush1.msra.mxu0 0.0
    %256 = vmatprep.subr.mxu0 0.0
    %257 = vmatpush1.msra.mxu0 0.0
    %258 = vmatprep.subr.mxu0 0.0
    %259 = vmatpush1.msra.mxu0 0.0
    %260 = vmatprep.subr.mxu0 0.0
    %261 = vmatpush1.msra.mxu0 0.0
    %262 = vmatprep.subr.mxu0 0.0
    %263 = vmatpush1.msra.mxu0 0.0
    %264 = vmatprep.subr.mxu0 0.0
    %265 = vmatpush1.msra.mxu0 0.0
    %266 = vmatprep.subr.mxu0 0.0
    %267 = vmatpush1.msra.mxu0 0.0
    %268 = vmatprep.subr.mxu0 0.0
    %269 = vmatpush1.msra.mxu0 0.0
    %270 = vmatprep.subr.mxu0 0.0
    %271 = vmatpush1.msra.mxu0 0.0
    %272 = vmatprep.subr.mxu0 0.0
    %273 = vmatpush1.msra.mxu0 0.0
    %274 = vmatprep.subr.mxu0 0.0
    %275 = vmatpush1.msra.mxu0 0.0
    %276 = vmatprep.subr.mxu0 0.0
    %277 = vmatpush1.msra.mxu0 0.0
    %278 = vmatprep.subr.mxu0 0.0
    %279 = vmatpush1.msra.mxu0 0.0
    %280 = vmatprep.mubr.f32.mxu0 0.0
    %281 = vmatmul.mubr.f32.gmra.mrb[0].mxu0 %v69
    %v282 = vpop.f32.mrb[0].mxu0
    %v283 = vadd.f32 0.0, %v282
    %v284 = vpop.f32.mrb[0].mxu0
    %v285 = vadd.f32 0.0, %v284
    %286 = vdwg.mxu0
    %v287 = vadd.f32 %v74, %v212
    %v288 = vadd.f32 %v75, %v214
    %v289 = vadd.f32 %v76, %v283
    %v290 = vadd.f32 %v77, %v285
    %v291 = vld [vmem:[#allocation9] sm:$0xff]
    %v292 = vld [vmem:[#allocation9 + $0x8] sm:$0xff]
    %v293 = vld [vmem:[#allocation9 + $0x10] sm:$0xff]
    %v294 = vld [vmem:[#allocation9 + $0x18] sm:$0xff]
    %v295 = vld [vmem:[#allocation9 + $0x20] sm:$0xff]
    %v296 = vld [vmem:[#allocation9 + $0x28] sm:$0xff]
    %v297 = vld [vmem:[#allocation9 + $0x30] sm:$0xff]
    %v298 = vld [vmem:[#allocation9 + $0x38] sm:$0xff]
    %v299 = vld [vmem:[#allocation9 + $0x40] sm:$0xff]
    %v300 = vld [vmem:[#allocation9 + $0x48] sm:$0xff]
    %v301 = vld [vmem:[#allocation9 + $0x50] sm:$0xff]
    %v302 = vld [vmem:[#allocation9 + $0x58] sm:$0xff]
    %v303 = vld [vmem:[#allocation9 + $0x60] sm:$0xff]
    %v304 = vld [vmem:[#allocation9 + $0x68] sm:$0xff]
    %v305 = vld [vmem:[#allocation9 + $0x70] sm:$0xff]
    %v306 = vld [vmem:[#allocation9 + $0x78] sm:$0xff]
    %307 = vmatprep.subr.mxu0 0.0
    %308 = vmatpush1.msra.mxu0 %v291
    %309 = vmatprep.subr.mxu0 0.0
    %310 = vmatpush1.msra.mxu0 %v292
    %311 = vmatprep.subr.mxu0 0.0
    %312 = vmatpush1.msra.mxu0 %v293
    %313 = vmatprep.subr.mxu0 0.0
    %314 = vmatpush1.msra.mxu0 %v294
    %315 = vmatprep.subr.mxu0 0.0
    %316 = vmatpush1.msra.mxu0 %v295
    %317 = vmatprep.subr.mxu0 0.0
    %318 = vmatpush1.msra.mxu0 %v296
    %319 = vmatprep.subr.mxu0 0.0
    %320 = vmatpush1.msra.mxu0 %v297
    %321 = vmatprep.subr.mxu0 0.0
    %322 = vmatpush1.msra.mxu0 %v298
    %323 = vmatprep.subr.mxu0 0.0
    %324 = vmatpush1.msra.mxu0 %v299
    %325 = vmatprep.subr.mxu0 0.0
    %326 = vmatpush1.msra.mxu0 %v300
    %327 = vmatprep.subr.mxu0 0.0
    %328 = vmatpush1.msra.mxu0 %v301
    %329 = vmatprep.subr.mxu0 0.0
    %330 = vmatpush1.msra.mxu0 %v302
    %331 = vmatprep.subr.mxu0 0.0
    %332 = vmatpush1.msra.mxu0 %v303
    %333 = vmatprep.subr.mxu0 0.0
    %334 = vmatpush1.msra.mxu0 %v304
    %335 = vmatprep.subr.mxu0 0.0
    %336 = vmatpush1.msra.mxu0 %v305
    %337 = vmatprep.subr.mxu0 0.0
    %338 = vmatpush1.msra.mxu0 %v306
    %339 = vmatprep.subr.mxu0 0.0
    %340 = vmatpush1.msra.mxu0 0.0
    %341 = vmatprep.subr.mxu0 0.0
    %342 = vmatpush1.msra.mxu0 0.0
    %343 = vmatprep.subr.mxu0 0.0
    %344 = vmatpush1.msra.mxu0 0.0
    %345 = vmatprep.subr.mxu0 0.0
    %346 = vmatpush1.msra.mxu0 0.0
    %347 = vmatprep.subr.mxu0 0.0
    %348 = vmatpush1.msra.mxu0 0.0
    %349 = vmatprep.subr.mxu0 0.0
    %350 = vmatpush1.msra.mxu0 0.0
    %351 = vmatprep.subr.mxu0 0.0
    %352 = vmatpush1.msra.mxu0 0.0
    %353 = vmatprep.subr.mxu0 0.0
    %354 = vmatpush1.msra.mxu0 0.0
    %355 = vmatprep.subr.mxu0 0.0
    %356 = vmatpush1.msra.mxu0 0.0
    %357 = vmatprep.subr.mxu0 0.0
    %358 = vmatpush1.msra.mxu0 0.0
    %359 = vmatprep.subr.mxu0 0.0
    %360 = vmatpush1.msra.mxu0 0.0
    %361 = vmatprep.subr.mxu0 0.0
    %362 = vmatpush1.msra.mxu0 0.0
    %363 = vmatprep.subr.mxu0 0.0
    %364 = vmatpush1.msra.mxu0 0.0
    %365 = vmatprep.subr.mxu0 0.0
    %366 = vmatpush1.msra.mxu0 0.0
    %367 = vmatprep.subr.mxu0 0.0
    %368 = vmatpush1.msra.mxu0 0.0
    %369 = vmatprep.subr.mxu0 0.0
    %370 = vmatpush1.msra.mxu0 0.0
    %371 = vmatprep.mubr.f32.mxu0 0.0
    %372 = vmatmul.mubr.f32.gmra.mrb[0].mxu0 %v70
    %v373 = vpop.f32.mrb[0].mxu0
    %v374 = vadd.f32 0.0, %v373
    %v375 = vpop.f32.mrb[0].mxu0
    %376 = vdwg.mxu0
    %v377 = vadd.f32 %v68, %v374
    %v378 = vtanh.pop %v377
    %v379 = vsub.f32 %v70, %v378
    %v380 = vstv %s80
    %v381 = vmul.f32 %v378, %v380
    %v382 = vadd.f32 %v379, %v381
    %v383 = vxor.u32 %v287, 2147483648
    %v384 = vmul.f32 %v383, 1.442695
    %v385 = vpow.pop %v384
    %v386 = vadd.f32 %v385, 1.0
    %v387 = vrcp.pop %v386
    %v388 = vmul.f32 1.0, %v387
    %v389 = vxor.u32 %v288, 2147483648
    %v390 = vmul.f32 %v389, 1.442695
    %v391 = vpow.pop %v390
    %v392 = vadd.f32 %v391, 1.0
    %v393 = vrcp.pop %v392
    %v394 = vmul.f32 1.0, %v393
    %v395 = vxor.u32 %v289, 2147483648
    %v396 = vmul.f32 %v395, 1.442695
    %v397 = vpow.pop %v396
    %v398 = vadd.f32 %v397, 1.0
    %v399 = vrcp.pop %v398
    %v400 = vmul.f32 1.0, %v399
    %v401 = vtanh.pop %v290
    %v402 = vmul.f32 %v394, %v382
    %v403 = vmul.f32 %v388, %v401
    %v404 = vadd.f32 %v402, %v403
    %v405 = vtanh.pop %v70
    %v406 = vmul.f32 %v400, %v405
    %s407 = sadd.s32 %s79, 1
    %s408 = sld [smem:[#allocation4 + %s407]]
    %409 = vmatprep.subr.mxu0 %v82
    %410 = vmatpush1.msra.mxu0 %v81
    %411 = vmatprep.subr.mxu0 %v86
    %412 = vmatpush1.msra.mxu0 %v85
    %413 = vmatprep.subr.mxu0 %v90
    %414 = vmatpush1.msra.mxu0 %v89
    %415 = vmatprep.subr.mxu0 %v94
    %416 = vmatpush1.msra.mxu0 %v93
    %417 = vmatprep.subr.mxu0 %v98
    %418 = vmatpush1.msra.mxu0 %v97
    %419 = vmatprep.subr.mxu0 %v102
    %420 = vmatpush1.msra.mxu0 %v101
    %421 = vmatprep.subr.mxu0 %v106
    %422 = vmatpush1.msra.mxu0 %v105
    %423 = vmatprep.subr.mxu0 %v110
    %424 = vmatpush1.msra.mxu0 %v109
    %425 = vmatprep.subr.mxu0 %v114
    %426 = vmatpush1.msra.mxu0 %v113
    %427 = vmatprep.subr.mxu0 %v118
    %428 = vmatpush1.msra.mxu0 %v117
    %429 = vmatprep.subr.mxu0 %v122
    %430 = vmatpush1.msra.mxu0 %v121
    %431 = vmatprep.subr.mxu0 %v126
    %432 = vmatpush1.msra.mxu0 %v125
    %433 = vmatprep.subr.mxu0 %v130
    %434 = vmatpush1.msra.mxu0 %v129
    %435 = vmatprep.subr.mxu0 %v134
    %436 = vmatpush1.msra.mxu0 %v133
    %437 = vmatprep.subr.mxu0 %v138
    %438 = vmatpush1.msra.mxu0 %v137
    %439 = vmatprep.subr.mxu0 %v142
    %440 = vmatpush1.msra.mxu0 %v141
    %441 = vmatprep.subr.mxu0 0.0
    %442 = vmatpush1.msra.mxu0 0.0
    %443 = vmatprep.subr.mxu0 0.0
    %444 = vmatpush1.msra.mxu0 0.0
    %445 = vmatprep.subr.mxu0 0.0
    %446 = vmatpush1.msra.mxu0 0.0
    %447 = vmatprep.subr.mxu0 0.0
    %448 = vmatpush1.msra.mxu0 0.0
    %449 = vmatprep.subr.mxu0 0.0
    %450 = vmatpush1.msra.mxu0 0.0
    %451 = vmatprep.subr.mxu0 0.0
    %452 = vmatpush1.msra.mxu0 0.0
    %453 = vmatprep.subr.mxu0 0.0
    %454 = vmatpush1.msra.mxu0 0.0
    %455 = vmatprep.subr.mxu0 0.0
    %456 = vmatpush1.msra.mxu0 0.0
    %457 = vmatprep.subr.mxu0 0.0
    %458 = vmatpush1.msra.mxu0 0.0
    %459 = vmatprep.subr.mxu0 0.0
    %460 = vmatpush1.msra.mxu0 0.0
    %461 = vmatprep.subr.mxu0 0.0
    %462 = vmatpush1.msra.mxu0 0.0
    %463 = vmatprep.subr.mxu0 0.0
    %464 = vmatpush1.msra.mxu0 0.0
    %465 = vmatprep.subr.mxu0 0.0
    %466 = vmatpush1.msra.mxu0 0.0
    %467 = vmatprep.subr.mxu0 0.0
    %468 = vmatpush1.msra.mxu0 0.0
    %469 = vmatprep.subr.mxu0 0.0
    %470 = vmatpush1.msra.mxu0 0.0
    %471 = vmatprep.subr.mxu0 0.0
    %472 = vmatpush1.msra.mxu0 0.0
    %473 = vmatprep.mubr.f32.mxu0 0.0
    %474 = vmatmul.mubr.f32.gmra.mrb[0].mxu0 %v406
    %v475 = vpop.f32.mrb[0].mxu0
    %v476 = vadd.f32 0.0, %v475
    %v477 = vpop.f32.mrb[0].mxu0
    %v478 = vadd.f32 0.0, %v477
    %479 = vdwg.mxu0
    %480 = vmatprep.subr.mxu0 %v84
    %481 = vmatpush1.msra.mxu0 %v83
    %482 = vmatprep.subr.mxu0 %v88
    %483 = vmatpush1.msra.mxu0 %v87
    %484 = vmatprep.subr.mxu0 %v92
    %485 = vmatpush1.msra.mxu0 %v91
    %486 = vmatprep.subr.mxu0 %v96
    %487 = vmatpush1.msra.mxu0 %v95
    %488 = vmatprep.subr.mxu0 %v100
    %489 = vmatpush1.msra.mxu0 %v99
    %490 = vmatprep.subr.mxu0 %v104
    %491 = vmatpush1.msra.mxu0 %v103
    %492 = vmatprep.subr.mxu0 %v108
    %493 = vmatpush1.msra.mxu0 %v107
    %494 = vmatprep.subr.mxu0 %v112
    %495 = vmatpush1.msra.mxu0 %v111
    %496 = vmatprep.subr.mxu0 %v116
    %497 = vmatpush1.msra.mxu0 %v115
    %498 = vmatprep.subr.mxu0 %v120
    %499 = vmatpush1.msra.mxu0 %v119
    %500 = vmatprep.subr.mxu0 %v124
    %501 = vmatpush1.msra.mxu0 %v123
    %502 = vmatprep.subr.mxu0 %v128
    %503 = vmatpush1.msra.mxu0 %v127
    %504 = vmatprep.subr.mxu0 %v132
    %505 = vmatpush1.msra.mxu0 %v131
    %506 = vmatprep.subr.mxu0 %v136
    %507 = vmatpush1.msra.mxu0 %v135
    %508 = vmatprep.subr.mxu0 %v140
    %509 = vmatpush1.msra.mxu0 %v139
    %510 = vmatprep.subr.mxu0 %v144
    %511 = vmatpush1.msra.mxu0 %v143
    %512 = vmatprep.subr.mxu0 0.0
    %513 = vmatpush1.msra.mxu0 0.0
    %514 = vmatprep.subr.mxu0 0.0
    %515 = vmatpush1.msra.mxu0 0.0
    %516 = vmatprep.subr.mxu0 0.0
    %517 = vmatpush1.msra.mxu0 0.0
    %518 = vmatprep.subr.mxu0 0.0
    %519 = vmatpush1.msra.mxu0 0.0
    %520 = vmatprep.subr.mxu0 0.0
    %521 = vmatpush1.msra.mxu0 0.0
    %522 = vmatprep.subr.mxu0 0.0
    %523 = vmatpush1.msra.mxu0 0.0
    %524 = vmatprep.subr.mxu0 0.0
    %525 = vmatpush1.msra.mxu0 0.0
    %526 = vmatprep.subr.mxu0 0.0
    %527 = vmatpush1.msra.mxu0 0.0
    %528 = vmatprep.subr.mxu0 0.0
    %529 = vmatpush1.msra.mxu0 0.0
    %530 = vmatprep.subr.mxu0 0.0
    %531 = vmatpush1.msra.mxu0 0.0
    %532 = vmatprep.subr.mxu0 0.0
    %533 = vmatpush1.msra.mxu0 0.0
    %534 = vmatprep.subr.mxu0 0.0
    %535 = vmatpush1.msra.mxu0 0.0
    %536 = vmatprep.subr.mxu0 0.0
    %537 = vmatpush1.msra.mxu0 0.0
    %538 = vmatprep.subr.mxu0 0.0
    %539 = vmatpush1.msra.mxu0 0.0
    %540 = vmatprep.subr.mxu0 0.0
    %541 = vmatpush1.msra.mxu0 0.0
    %542 = vmatprep.subr.mxu0 0.0
    %543 = vmatpush1.msra.mxu0 0.0
    %544 = vmatprep.mubr.f32.mxu0 0.0
    %545 = vmatmul.mubr.f32.gmra.mrb[0].mxu0 %v406
    %v546 = vpop.f32.mrb[0].mxu0
    %v547 = vadd.f32 0.0, %v546
    %v548 = vpop.f32.mrb[0].mxu0
    %v549 = vadd.f32 0.0, %v548
    %550 = vdwg.mxu0
    %v555 = vrot.slane %v476, 7
    %v556 = vrot.slane %v478, 7
    %v557 = vrot.slane %v547, 7
    %v558 = vrot.slane %v549, 7
    %v563 = vadd.f32 %v74, %v555
    %v564 = vadd.f32 %v75, %v556
    %v565 = vadd.f32 %v76, %v557
    %v566 = vadd.f32 %v77, %v558
    %567 = vmatprep.subr.mxu0 0.0
    %568 = vmatpush1.msra.mxu0 %v291
    %569 = vmatprep.subr.mxu0 0.0
    %570 = vmatpush1.msra.mxu0 %v292
    %571 = vmatprep.subr.mxu0 0.0
    %572 = vmatpush1.msra.mxu0 %v293
    %573 = vmatprep.subr.mxu0 0.0
    %574 = vmatpush1.msra.mxu0 %v294
    %575 = vmatprep.subr.mxu0 0.0
    %576 = vmatpush1.msra.mxu0 %v295
    %577 = vmatprep.subr.mxu0 0.0
    %578 = vmatpush1.msra.mxu0 %v296
    %579 = vmatprep.subr.mxu0 0.0
    %580 = vmatpush1.msra.mxu0 %v297
    %581 = vmatprep.subr.mxu0 0.0
    %582 = vmatpush1.msra.mxu0 %v298
    %583 = vmatprep.subr.mxu0 0.0
    %584 = vmatpush1.msra.mxu0 %v299
    %585 = vmatprep.subr.mxu0 0.0
    %586 = vmatpush1.msra.mxu0 %v300
    %587 = vmatprep.subr.mxu0 0.0
    %588 = vmatpush1.msra.mxu0 %v301
    %589 = vmatprep.subr.mxu0 0.0
    %590 = vmatpush1.msra.mxu0 %v302
    %591 = vmatprep.subr.mxu0 0.0
    %592 = vmatpush1.msra.mxu0 %v303
    %593 = vmatprep.subr.mxu0 0.0
    %594 = vmatpush1.msra.mxu0 %v304
    %595 = vmatprep.subr.mxu0 0.0
    %596 = vmatpush1.msra.mxu0 %v305
    %597 = vmatprep.subr.mxu0 0.0
    %598 = vmatpush1.msra.mxu0 %v306
    %599 = vmatprep.subr.mxu0 0.0
    %600 = vmatpush1.msra.mxu0 0.0
    %601 = vmatprep.subr.mxu0 0.0
    %602 = vmatpush1.msra.mxu0 0.0
    %603 = vmatprep.subr.mxu0 0.0
    %604 = vmatpush1.msra.mxu0 0.0
    %605 = vmatprep.subr.mxu0 0.0
    %606 = vmatpush1.msra.mxu0 0.0
    %607 = vmatprep.subr.mxu0 0.0
    %608 = vmatpush1.msra.mxu0 0.0
    %609 = vmatprep.subr.mxu0 0.0
    %610 = vmatpush1.msra.mxu0 0.0
    %611 = vmatprep.subr.mxu0 0.0
    %612 = vmatpush1.msra.mxu0 0.0
    %613 = vmatprep.subr.mxu0 0.0
    %614 = vmatpush1.msra.mxu0 0.0
    %615 = vmatprep.subr.mxu0 0.0
    %616 = vmatpush1.msra.mxu0 0.0
    %617 = vmatprep.subr.mxu0 0.0
    %618 = vmatpush1.msra.mxu0 0.0
    %619 = vmatprep.subr.mxu0 0.0
    %620 = vmatpush1.msra.mxu0 0.0
    %621 = vmatprep.subr.mxu0 0.0
    %622 = vmatpush1.msra.mxu0 0.0
    %623 = vmatprep.subr.mxu0 0.0
    %624 = vmatpush1.msra.mxu0 0.0
    %625 = vmatprep.subr.mxu0 0.0
    %626 = vmatpush1.msra.mxu0 0.0
    %627 = vmatprep.subr.mxu0 0.0
    %628 = vmatpush1.msra.mxu0 0.0
    %629 = vmatprep.subr.mxu0 0.0
    %630 = vmatpush1.msra.mxu0 0.0
    %631 = vmatprep.mubr.f32.mxu0 0.0
    %632 = vmatmul.mubr.f32.gmra.mrb[0].mxu0 %v404
    %v633 = vpop.f32.mrb[0].mxu0
    %v634 = vadd.f32 0.0, %v633
    %v635 = vpop.f32.mrb[0].mxu0
    %636 = vdwg.mxu0
    %v637 = vadd.f32 %v68, %v634
    %v638 = vtanh.pop %v637
    %v639 = vsub.f32 %v404, %v638
    %v640 = vstv %s408
    %v641 = vmul.f32 %v638, %v640
    %v642 = vadd.f32 %v639, %v641
    %v643 = vxor.u32 %v563, 2147483648
    %v644 = vmul.f32 %v643, 1.442695
    %v645 = vpow.pop %v644
    %v646 = vadd.f32 %v645, 1.0
    %v647 = vrcp.pop %v646
    %v648 = vmul.f32 1.0, %v647
    %v649 = vxor.u32 %v564, 2147483648
    %v650 = vmul.f32 %v649, 1.442695
    %v651 = vpow.pop %v650
    %v652 = vadd.f32 %v651, 1.0
    %v653 = vrcp.pop %v652
    %v654 = vmul.f32 1.0, %v653
    %v655 = vxor.u32 %v565, 2147483648
    %v656 = vmul.f32 %v655, 1.442695
    %v657 = vpow.pop %v656
    %v658 = vadd.f32 %v657, 1.0
    %v659 = vrcp.pop %v658
    %v660 = vmul.f32 1.0, %v659
    %v661 = vtanh.pop %v566
    %v663 = vrot.slane %v642, 7
    %v665 = vmul.f32 %v654, %v663
    %v666 = vmul.f32 %v648, %v661
    %v667 = vadd.f32 %v665, %v666
    %v668 = vtanh.pop %v404
    %v670 = vrot.slane %v668, 7
    %v672 = vmul.f32 %v660, %v670
    %s673 = sadd.s32 %s79, 2
    %s674 = sld [smem:[#allocation4 + %s673]]
    %v676 = vrot.slane %v672, 1
    %678 = vmatprep.subr.mxu0 %v82
    %679 = vmatpush1.msra.mxu0 %v81
    %680 = vmatprep.subr.mxu0 %v86
    %681 = vmatpush1.msra.mxu0 %v85
    %682 = vmatprep.subr.mxu0 %v90
    %683 = vmatpush1.msra.mxu0 %v89
    %684 = vmatprep.subr.mxu0 %v94
    %685 = vmatpush1.msra.mxu0 %v93
    %686 = vmatprep.subr.mxu0 %v98
    %687 = vmatpush1.msra.mxu0 %v97
    %688 = vmatprep.subr.mxu0 %v102
    %689 = vmatpush1.msra.mxu0 %v101
    %690 = vmatprep.subr.mxu0 %v106
    %691 = vmatpush1.msra.mxu0 %v105
    %692 = vmatprep.subr.mxu0 %v110
    %693 = vmatpush1.msra.mxu0 %v109
    %694 = vmatprep.subr.mxu0 %v114
    %695 = vmatpush1.msra.mxu0 %v113
    %696 = vmatprep.subr.mxu0 %v118
    %697 = vmatpush1.msra.mxu0 %v117
    %698 = vmatprep.subr.mxu0 %v122
    %699 = vmatpush1.msra.mxu0 %v121
    %700 = vmatprep.subr.mxu0 %v126
    %701 = vmatpush1.msra.mxu0 %v125
    %702 = vmatprep.subr.mxu0 %v130
    %703 = vmatpush1.msra.mxu0 %v129
    %704 = vmatprep.subr.mxu0 %v134
    %705 = vmatpush1.msra.mxu0 %v133
    %706 = vmatprep.subr.mxu0 %v138
    %707 = vmatpush1.msra.mxu0 %v137
    %708 = vmatprep.subr.mxu0 %v142
    %709 = vmatpush1.msra.mxu0 %v141
    %710 = vmatprep.subr.mxu0 0.0
    %711 = vmatpush1.msra.mxu0 0.0
    %712 = vmatprep.subr.mxu0 0.0
    %713 = vmatpush1.msra.mxu0 0.0
    %714 = vmatprep.subr.mxu0 0.0
    %715 = vmatpush1.msra.mxu0 0.0
    %716 = vmatprep.subr.mxu0 0.0
    %717 = vmatpush1.msra.mxu0 0.0
    %718 = vmatprep.subr.mxu0 0.0
    %719 = vmatpush1.msra.mxu0 0.0
    %720 = vmatprep.subr.mxu0 0.0
    %721 = vmatpush1.msra.mxu0 0.0
    %722 = vmatprep.subr.mxu0 0.0
    %723 = vmatpush1.msra.mxu0 0.0
    %724 = vmatprep.subr.mxu0 0.0
    %725 = vmatpush1.msra.mxu0 0.0
    %726 = vmatprep.subr.mxu0 0.0
    %727 = vmatpush1.msra.mxu0 0.0
    %728 = vmatprep.subr.mxu0 0.0
    %729 = vmatpush1.msra.mxu0 0.0
    %730 = vmatprep.subr.mxu0 0.0
    %731 = vmatpush1.msra.mxu0 0.0
    %732 = vmatprep.subr.mxu0 0.0
    %733 = vmatpush1.msra.mxu0 0.0
    %734 = vmatprep.subr.mxu0 0.0
    %735 = vmatpush1.msra.mxu0 0.0
    %736 = vmatprep.subr.mxu0 0.0
    %737 = vmatpush1.msra.mxu0 0.0
    %738 = vmatprep.subr.mxu0 0.0
    %739 = vmatpush1.msra.mxu0 0.0
    %740 = vmatprep.subr.mxu0 0.0
    %741 = vmatpush1.msra.mxu0 0.0
    %742 = vmatprep.mubr.f32.mxu0 0.0
    %743 = vmatmul.mubr.f32.gmra.mrb[0].mxu0 %v676
    %v744 = vpop.f32.mrb[0].mxu0
    %v745 = vadd.f32 0.0, %v744
    %v746 = vpop.f32.mrb[0].mxu0
    %v747 = vadd.f32 0.0, %v746
    %748 = vdwg.mxu0
    %749 = vmatprep.subr.mxu0 %v84
    %750 = vmatpush1.msra.mxu0 %v83
    %751 = vmatprep.subr.mxu0 %v88
    %752 = vmatpush1.msra.mxu0 %v87
    %753 = vmatprep.subr.mxu0 %v92
    %754 = vmatpush1.msra.mxu0 %v91
    %755 = vmatprep.subr.mxu0 %v96
    %756 = vmatpush1.msra.mxu0 %v95
    %757 = vmatprep.subr.mxu0 %v100
    %758 = vmatpush1.msra.mxu0 %v99
    %759 = vmatprep.subr.mxu0 %v104
    %760 = vmatpush1.msra.mxu0 %v103
    %761 = vmatprep.subr.mxu0 %v108
    %762 = vmatpush1.msra.mxu0 %v107
    %763 = vmatprep.subr.mxu0 %v112
    %764 = vmatpush1.msra.mxu0 %v111
    %765 = vmatprep.subr.mxu0 %v116
    %766 = vmatpush1.msra.mxu0 %v115
    %767 = vmatprep.subr.mxu0 %v120
    %768 = vmatpush1.msra.mxu0 %v119
    %769 = vmatprep.subr.mxu0 %v124
    %770 = vmatpush1.msra.mxu0 %v123
    %771 = vmatprep.subr.mxu0 %v128
    %772 = vmatpush1.msra.mxu0 %v127
    %773 = vmatprep.subr.mxu0 %v132
    %774 = vmatpush1.msra.mxu0 %v131
    %775 = vmatprep.subr.mxu0 %v136
    %776 = vmatpush1.msra.mxu0 %v135
    %777 = vmatprep.subr.mxu0 %v140
    %778 = vmatpush1.msra.mxu0 %v139
    %779 = vmatprep.subr.mxu0 %v144
    %780 = vmatpush1.msra.mxu0 %v143
    %781 = vmatprep.subr.mxu0 0.0
    %782 = vmatpush1.msra.mxu0 0.0
    %783 = vmatprep.subr.mxu0 0.0
    %784 = vmatpush1.msra.mxu0 0.0
    %785 = vmatprep.subr.mxu0 0.0
    %786 = vmatpush1.msra.mxu0 0.0
    %787 = vmatprep.subr.mxu0 0.0
    %788 = vmatpush1.msra.mxu0 0.0
    %789 = vmatprep.subr.mxu0 0.0
    %790 = vmatpush1.msra.mxu0 0.0
    %791 = vmatprep.subr.mxu0 0.0
    %792 = vmatpush1.msra.mxu0 0.0
    %793 = vmatprep.subr.mxu0 0.0
    %794 = vmatpush1.msra.mxu0 0.0
    %795 = vmatprep.subr.mxu0 0.0
    %796 = vmatpush1.msra.mxu0 0.0
    %797 = vmatprep.subr.mxu0 0.0
    %798 = vmatpush1.msra.mxu0 0.0
    %799 = vmatprep.subr.mxu0 0.0
    %800 = vmatpush1.msra.mxu0 0.0
    %801 = vmatprep.subr.mxu0 0.0
    %802 = vmatpush1.msra.mxu0 0.0
    %803 = vmatprep.subr.mxu0 0.0
    %804 = vmatpush1.msra.mxu0 0.0
    %805 = vmatprep.subr.mxu0 0.0
    %806 = vmatpush1.msra.mxu0 0.0
    %807 = vmatprep.subr.mxu0 0.0
    %808 = vmatpush1.msra.mxu0 0.0
    %809 = vmatprep.subr.mxu0 0.0
    %810 = vmatpush1.msra.mxu0 0.0
    %811 = vmatprep.subr.mxu0 0.0
    %812 = vmatpush1.msra.mxu0 0.0
    %813 = vmatprep.mubr.f32.mxu0 0.0
    %814 = vmatmul.mubr.f32.gmra.mrb[0].mxu0 %v676
    %v815 = vpop.f32.mrb[0].mxu0
    %v816 = vadd.f32 0.0, %v815
    %v817 = vpop.f32.mrb[0].mxu0
    %v818 = vadd.f32 0.0, %v817
    %819 = vdwg.mxu0
    %v824 = vrot.slane %v745, 6
    %v825 = vrot.slane %v747, 6
    %v826 = vrot.slane %v816, 6
    %v827 = vrot.slane %v818, 6
    %v832 = vadd.f32 %v74, %v824
    %v833 = vadd.f32 %v75, %v825
    %v834 = vadd.f32 %v76, %v826
    %v835 = vadd.f32 %v77, %v827
    %v837 = vrot.slane %v667, 1
    %839 = vmatprep.subr.mxu0 0.0
    %840 = vmatpush1.msra.mxu0 %v291
    %841 = vmatprep.subr.mxu0 0.0
    %842 = vmatpush1.msra.mxu0 %v292
    %843 = vmatprep.subr.mxu0 0.0
    %844 = vmatpush1.msra.mxu0 %v293
    %845 = vmatprep.subr.mxu0 0.0
    %846 = vmatpush1.msra.mxu0 %v294
    %847 = vmatprep.subr.mxu0 0.0
    %848 = vmatpush1.msra.mxu0 %v295
    %849 = vmatprep.subr.mxu0 0.0
    %850 = vmatpush1.msra.mxu0 %v296
    %851 = vmatprep.subr.mxu0 0.0
    %852 = vmatpush1.msra.mxu0 %v297
    %853 = vmatprep.subr.mxu0 0.0
    %854 = vmatpush1.msra.mxu0 %v298
    %855 = vmatprep.subr.mxu0 0.0
    %856 = vmatpush1.msra.mxu0 %v299
    %857 = vmatprep.subr.mxu0 0.0
    %858 = vmatpush1.msra.mxu0 %v300
    %859 = vmatprep.subr.mxu0 0.0
    %860 = vmatpush1.msra.mxu0 %v301
    %861 = vmatprep.subr.mxu0 0.0
    %862 = vmatpush1.msra.mxu0 %v302
    %863 = vmatprep.subr.mxu0 0.0
    %864 = vmatpush1.msra.mxu0 %v303
    %865 = vmatprep.subr.mxu0 0.0
    %866 = vmatpush1.msra.mxu0 %v304
    %867 = vmatprep.subr.mxu0 0.0
    %868 = vmatpush1.msra.mxu0 %v305
    %869 = vmatprep.subr.mxu0 0.0
    %870 = vmatpush1.msra.mxu0 %v306
    %871 = vmatprep.subr.mxu0 0.0
    %872 = vmatpush1.msra.mxu0 0.0
    %873 = vmatprep.subr.mxu0 0.0
    %874 = vmatpush1.msra.mxu0 0.0
    %875 = vmatprep.subr.mxu0 0.0
    %876 = vmatpush1.msra.mxu0 0.0
    %877 = vmatprep.subr.mxu0 0.0
    %878 = vmatpush1.msra.mxu0 0.0
    %879 = vmatprep.subr.mxu0 0.0
    %880 = vmatpush1.msra.mxu0 0.0
    %881 = vmatprep.subr.mxu0 0.0
    %882 = vmatpush1.msra.mxu0 0.0
    %883 = vmatprep.subr.mxu0 0.0
    %884 = vmatpush1.msra.mxu0 0.0
    %885 = vmatprep.subr.mxu0 0.0
    %886 = vmatpush1.msra.mxu0 0.0
    %887 = vmatprep.subr.mxu0 0.0
    %888 = vmatpush1.msra.mxu0 0.0
    %889 = vmatprep.subr.mxu0 0.0
    %890 = vmatpush1.msra.mxu0 0.0
    %891 = vmatprep.subr.mxu0 0.0
    %892 = vmatpush1.msra.mxu0 0.0
    %893 = vmatprep.subr.mxu0 0.0
    %894 = vmatpush1.msra.mxu0 0.0
    %895 = vmatprep.subr.mxu0 0.0
    %896 = vmatpush1.msra.mxu0 0.0
    %897 = vmatprep.subr.mxu0 0.0
    %898 = vmatpush1.msra.mxu0 0.0
    %899 = vmatprep.subr.mxu0 0.0
    %900 = vmatpush1.msra.mxu0 0.0
    %901 = vmatprep.subr.mxu0 0.0
    %902 = vmatpush1.msra.mxu0 0.0
    %903 = vmatprep.mubr.f32.mxu0 0.0
    %904 = vmatmul.mubr.f32.gmra.mrb[0].mxu0 %v837
    %v905 = vpop.f32.mrb[0].mxu0
    %v906 = vadd.f32 0.0, %v905
    %v907 = vpop.f32.mrb[0].mxu0
    %908 = vdwg.mxu0
    %v909 = vadd.f32 %v68, %v906
    %v910 = vtanh.pop %v909
    %v912 = vlaneseq
    %v913 = vshrl.u32 %v912, 7
    %v914 = vsub.s32 0, %v913
    %v915 = vrot.slane %v910, %v914
    %v917 = vsub.f32 %v667, %v915
    %v918 = vstv %s674
    %v919 = vmul.f32 %v910, %v918
    %v921 = vlaneseq
    %v922 = vshrl.u32 %v921, 7
    %v923 = vsub.s32 0, %v922
    %v924 = vrot.slane %v919, %v923
    %v926 = vadd.f32 %v917, %v924
    %v927 = vxor.u32 %v832, 2147483648
    %v928 = vmul.f32 %v927, 1.442695
    %v929 = vpow.pop %v928
    %v930 = vadd.f32 %v929, 1.0
    %v931 = vrcp.pop %v930
    %v932 = vmul.f32 1.0, %v931
    %v933 = vxor.u32 %v833, 2147483648
    %v934 = vmul.f32 %v933, 1.442695
    %v935 = vpow.pop %v934
    %v936 = vadd.f32 %v935, 1.0
    %v937 = vrcp.pop %v936
    %v938 = vmul.f32 1.0, %v937
    %v939 = vxor.u32 %v834, 2147483648
    %v940 = vmul.f32 %v939, 1.442695
    %v941 = vpow.pop %v940
    %v942 = vadd.f32 %v941, 1.0
    %v943 = vrcp.pop %v942
    %v944 = vmul.f32 1.0, %v943
    %v945 = vtanh.pop %v835
    %v947 = vrot.slane %v926, 7
    %v949 = vmul.f32 %v938, %v947
    %v950 = vmul.f32 %v932, %v945
    %v951 = vadd.f32 %v949, %v950
    %v952 = vtanh.pop %v667
    %v954 = vrot.slane %v952, 7
    %v956 = vmul.f32 %v944, %v954
    %s957 = sadd.s32 %s79, 3
    %s958 = sld [smem:[#allocation4 + %s957]]
    %v960 = vrot.slane %v956, 2
    %962 = vmatprep.subr.mxu0 %v82
    %963 = vmatpush1.msra.mxu0 %v81
    %964 = vmatprep.subr.mxu0 %v86
    %965 = vmatpush1.msra.mxu0 %v85
    %966 = vmatprep.subr.mxu0 %v90
    %967 = vmatpush1.msra.mxu0 %v89
    %968 = vmatprep.subr.mxu0 %v94
    %969 = vmatpush1.msra.mxu0 %v93
    %970 = vmatprep.subr.mxu0 %v98
    %971 = vmatpush1.msra.mxu0 %v97
    %972 = vmatprep.subr.mxu0 %v102
    %973 = vmatpush1.msra.mxu0 %v101
    %974 = vmatprep.subr.mxu0 %v106
    %975 = vmatpush1.msra.mxu0 %v105
    %976 = vmatprep.subr.mxu0 %v110
    %977 = vmatpush1.msra.mxu0 %v109
    %978 = vmatprep.subr.mxu0 %v114
    %979 = vmatpush1.msra.mxu0 %v113
    %980 = vmatprep.subr.mxu0 %v118
    %981 = vmatpush1.msra.mxu0 %v117
    %982 = vmatprep.subr.mxu0 %v122
    %983 = vmatpush1.msra.mxu0 %v121
    %984 = vmatprep.subr.mxu0 %v126
    %985 = vmatpush1.msra.mxu0 %v125
    %986 = vmatprep.subr.mxu0 %v130
    %987 = vmatpush1.msra.mxu0 %v129
    %988 = vmatprep.subr.mxu0 %v134
    %989 = vmatpush1.msra.mxu0 %v133
    %990 = vmatprep.subr.mxu0 %v138
    %991 = vmatpush1.msra.mxu0 %v137
    %992 = vmatprep.subr.mxu0 %v142
    %993 = vmatpush1.msra.mxu0 %v141
    %994 = vmatprep.subr.mxu0 0.0
    %995 = vmatpush1.msra.mxu0 0.0
    %996 = vmatprep.subr.mxu0 0.0
    %997 = vmatpush1.msra.mxu0 0.0
    %998 = vmatprep.subr.mxu0 0.0
    %999 = vmatpush1.msra.mxu0 0.0
    %1000 = vmatprep.subr.mxu0 0.0
    %1001 = vmatpush1.msra.mxu0 0.0
    %1002 = vmatprep.subr.mxu0 0.0
    %1003 = vmatpush1.msra.mxu0 0.0
    %1004 = vmatprep.subr.mxu0 0.0
    %1005 = vmatpush1.msra.mxu0 0.0
    %1006 = vmatprep.subr.mxu0 0.0
    %1007 = vmatpush1.msra.mxu0 0.0
    %1008 = vmatprep.subr.mxu0 0.0
    %1009 = vmatpush1.msra.mxu0 0.0
    %1010 = vmatprep.subr.mxu0 0.0
    %1011 = vmatpush1.msra.mxu0 0.0
    %1012 = vmatprep.subr.mxu0 0.0
    %1013 = vmatpush1.msra.mxu0 0.0
    %1014 = vmatprep.subr.mxu0 0.0
    %1015 = vmatpush1.msra.mxu0 0.0
    %1016 = vmatprep.subr.mxu0 0.0
    %1017 = vmatpush1.msra.mxu0 0.0
    %1018 = vmatprep.subr.mxu0 0.0
    %1019 = vmatpush1.msra.mxu0 0.0
    %1020 = vmatprep.subr.mxu0 0.0
    %1021 = vmatpush1.msra.mxu0 0.0
    %1022 = vmatprep.subr.mxu0 0.0
    %1023 = vmatpush1.msra.mxu0 0.0
    %1024 = vmatprep.subr.mxu0 0.0
    %1025 = vmatpush1.msra.mxu0 0.0
    %1026 = vmatprep.mubr.f32.mxu0 0.0
    %1027 = vmatmul.mubr.f32.gmra.mrb[0].mxu0 %v960
    %v1028 = vpop.f32.mrb[0].mxu0
    %v1029 = vadd.f32 0.0, %v1028
    %v1030 = vpop.f32.mrb[0].mxu0
    %v1031 = vadd.f32 0.0, %v1030
    %1032 = vdwg.mxu0
    %1033 = vmatprep.subr.mxu0 %v84
    %1034 = vmatpush1.msra.mxu0 %v83
    %1035 = vmatprep.subr.mxu0 %v88
    %1036 = vmatpush1.msra.mxu0 %v87
    %1037 = vmatprep.subr.mxu0 %v92
    %1038 = vmatpush1.msra.mxu0 %v91
    %1039 = vmatprep.subr.mxu0 %v96
    %1040 = vmatpush1.msra.mxu0 %v95
    %1041 = vmatprep.subr.mxu0 %v100
    %1042 = vmatpush1.msra.mxu0 %v99
    %1043 = vmatprep.subr.mxu0 %v104
    %1044 = vmatpush1.msra.mxu0 %v103
    %1045 = vmatprep.subr.mxu0 %v108
    %1046 = vmatpush1.msra.mxu0 %v107
    %1047 = vmatprep.subr.mxu0 %v112
    %1048 = vmatpush1.msra.mxu0 %v111
    %1049 = vmatprep.subr.mxu0 %v116
    %1050 = vmatpush1.msra.mxu0 %v115
    %1051 = vmatprep.subr.mxu0 %v120
    %1052 = vmatpush1.msra.mxu0 %v119
    %1053 = vmatprep.subr.mxu0 %v124
    %1054 = vmatpush1.msra.mxu0 %v123
    %1055 = vmatprep.subr.mxu0 %v128
    %1056 = vmatpush1.msra.mxu0 %v127
    %1057 = vmatprep.subr.mxu0 %v132
    %1058 = vmatpush1.msra.mxu0 %v131
    %1059 = vmatprep.subr.mxu0 %v136
    %1060 = vmatpush1.msra.mxu0 %v135
    %1061 = vmatprep.subr.mxu0 %v140
    %1062 = vmatpush1.msra.mxu0 %v139
    %1063 = vmatprep.subr.mxu0 %v144
    %1064 = vmatpush1.msra.mxu0 %v143
    %1065 = vmatprep.subr.mxu0 0.0
    %1066 = vmatpush1.msra.mxu0 0.0
    %1067 = vmatprep.subr.mxu0 0.0
    %1068 = vmatpush1.msra.mxu0 0.0
    %1069 = vmatprep.subr.mxu0 0.0
    %1070 = vmatpush1.msra.mxu0 0.0
    %1071 = vmatprep.subr.mxu0 0.0
    %1072 = vmatpush1.msra.mxu0 0.0
    %1073 = vmatprep.subr.mxu0 0.0
    %1074 = vmatpush1.msra.mxu0 0.0
    %1075 = vmatprep.subr.mxu0 0.0
    %1076 = vmatpush1.msra.mxu0 0.0
    %1077 = vmatprep.subr.mxu0 0.0
    %1078 = vmatpush1.msra.mxu0 0.0
    %1079 = vmatprep.subr.mxu0 0.0
    %1080 = vmatpush1.msra.mxu0 0.0
    %1081 = vmatprep.subr.mxu0 0.0
    %1082 = vmatpush1.msra.mxu0 0.0
    %1083 = vmatprep.subr.mxu0 0.0
    %1084 = vmatpush1.msra.mxu0 0.0
    %1085 = vmatprep.subr.mxu0 0.0
    %1086 = vmatpush1.msra.mxu0 0.0
    %1087 = vmatprep.subr.mxu0 0.0
    %1088 = vmatpush1.msra.mxu0 0.0
    %1089 = vmatprep.subr.mxu0 0.0
    %1090 = vmatpush1.msra.mxu0 0.0
    %1091 = vmatprep.subr.mxu0 0.0
    %1092 = vmatpush1.msra.mxu0 0.0
    %1093 = vmatprep.subr.mxu0 0.0
    %1094 = vmatpush1.msra.mxu0 0.0
    %1095 = vmatprep.subr.mxu0 0.0
    %1096 = vmatpush1.msra.mxu0 0.0
    %1097 = vmatprep.mubr.f32.mxu0 0.0
    %1098 = vmatmul.mubr.f32.gmra.mrb[0].mxu0 %v960
    %v1099 = vpop.f32.mrb[0].mxu0
    %v1100 = vadd.f32 0.0, %v1099
    %v1101 = vpop.f32.mrb[0].mxu0
    %v1102 = vadd.f32 0.0, %v1101
    %1103 = vdwg.mxu0
    %v1108 = vrot.slane %v1029, 5
    %v1109 = vrot.slane %v1031, 5
    %v1110 = vrot.slane %v1100, 5
    %v1111 = vrot.slane %v1102, 5
    %v1116 = vadd.f32 %v74, %v1108
    %v1117 = vadd.f32 %v75, %v1109
    %v1118 = vadd.f32 %v76, %v1110
    %v1119 = vadd.f32 %v77, %v1111
    %v1121 = vrot.slane %v951, 2
    %1123 = vmatprep.subr.mxu0 0.0
    %1124 = vmatpush1.msra.mxu0 %v291
    %1125 = vmatprep.subr.mxu0 0.0
    %1126 = vmatpush1.msra.mxu0 %v292
    %1127 = vmatprep.subr.mxu0 0.0
    %1128 = vmatpush1.msra.mxu0 %v293
    %1129 = vmatprep.subr.mxu0 0.0
    %1130 = vmatpush1.msra.mxu0 %v294
    %1131 = vmatprep.subr.mxu0 0.0
    %1132 = vmatpush1.msra.mxu0 %v295
    %1133 = vmatprep.subr.mxu0 0.0
    %1134 = vmatpush1.msra.mxu0 %v296
    %1135 = vmatprep.subr.mxu0 0.0
    %1136 = vmatpush1.msra.mxu0 %v297
    %1137 = vmatprep.subr.mxu0 0.0
    %1138 = vmatpush1.msra.mxu0 %v298
    %1139 = vmatprep.subr.mxu0 0.0
    %1140 = vmatpush1.msra.mxu0 %v299
    %1141 = vmatprep.subr.mxu0 0.0
    %1142 = vmatpush1.msra.mxu0 %v300
    %1143 = vmatprep.subr.mxu0 0.0
    %1144 = vmatpush1.msra.mxu0 %v301
    %1145 = vmatprep.subr.mxu0 0.0
    %1146 = vmatpush1.msra.mxu0 %v302
    %1147 = vmatprep.subr.mxu0 0.0
    %1148 = vmatpush1.msra.mxu0 %v303
    %1149 = vmatprep.subr.mxu0 0.0
    %1150 = vmatpush1.msra.mxu0 %v304
    %1151 = vmatprep.subr.mxu0 0.0
    %1152 = vmatpush1.msra.mxu0 %v305
    %1153 = vmatprep.subr.mxu0 0.0
    %1154 = vmatpush1.msra.mxu0 %v306
    %1155 = vmatprep.subr.mxu0 0.0
    %1156 = vmatpush1.msra.mxu0 0.0
    %1157 = vmatprep.subr.mxu0 0.0
    %1158 = vmatpush1.msra.mxu0 0.0
    %1159 = vmatprep.subr.mxu0 0.0
    %1160 = vmatpush1.msra.mxu0 0.0
    %1161 = vmatprep.subr.mxu0 0.0
    %1162 = vmatpush1.msra.mxu0 0.0
    %1163 = vmatprep.subr.mxu0 0.0
    %1164 = vmatpush1.msra.mxu0 0.0
    %1165 = vmatprep.subr.mxu0 0.0
    %1166 = vmatpush1.msra.mxu0 0.0
    %1167 = vmatprep.subr.mxu0 0.0
    %1168 = vmatpush1.msra.mxu0 0.0
    %1169 = vmatprep.subr.mxu0 0.0
    %1170 = vmatpush1.msra.mxu0 0.0
    %1171 = vmatprep.subr.mxu0 0.0
    %1172 = vmatpush1.msra.mxu0 0.0
    %1173 = vmatprep.subr.mxu0 0.0
    %1174 = vmatpush1.msra.mxu0 0.0
    %1175 = vmatprep.subr.mxu0 0.0
    %1176 = vmatpush1.msra.mxu0 0.0
    %1177 = vmatprep.subr.mxu0 0.0
    %1178 = vmatpush1.msra.mxu0 0.0
    %1179 = vmatprep.subr.mxu0 0.0
    %1180 = vmatpush1.msra.mxu0 0.0
    %1181 = vmatprep.subr.mxu0 0.0
    %1182 = vmatpush1.msra.mxu0 0.0
    %1183 = vmatprep.subr.mxu0 0.0
    %1184 = vmatpush1.msra.mxu0 0.0
    %1185 = vmatprep.subr.mxu0 0.0
    %1186 = vmatpush1.msra.mxu0 0.0
    %1187 = vmatprep.mubr.f32.mxu0 0.0
    %1188 = vmatmul.mubr.f32.gmra.mrb[0].mxu0 %v1121
    %v1189 = vpop.f32.mrb[0].mxu0
    %v1190 = vadd.f32 0.0, %v1189
    %v1191 = vpop.f32.mrb[0].mxu0
    %1192 = vdwg.mxu0
    %v1193 = vadd.f32 %v68, %v1190
    %v1194 = vtanh.pop %v1193
    %v1196 = vlaneseq
    %v1197 = vshrl.u32 %v1196, 7
    %v1198 = vsub.s32 0, %v1197
    %v1199 = vrot.slane %v1194, %v1198
    %v1201 = vsub.f32 %v951, %v1199
    %v1202 = vstv %s958
    %v1203 = vmul.f32 %v1194, %v1202
    %v1205 = vlaneseq
    %v1206 = vshrl.u32 %v1205, 7
    %v1207 = vsub.s32 0, %v1206
    %v1208 = vrot.slane %v1203, %v1207
    %v1210 = vadd.f32 %v1201, %v1208
    %v1211 = vxor.u32 %v1116, 2147483648
    %v1212 = vmul.f32 %v1211, 1.442695
    %v1213 = vpow.pop %v1212
    %v1214 = vadd.f32 %v1213, 1.0
    %v1215 = vrcp.pop %v1214
    %v1216 = vmul.f32 1.0, %v1215
    %v1217 = vxor.u32 %v1117, 2147483648
    %v1218 = vmul.f32 %v1217, 1.442695
    %v1219 = vpow.pop %v1218
    %v1220 = vadd.f32 %v1219, 1.0
    %v1221 = vrcp.pop %v1220
    %v1222 = vmul.f32 1.0, %v1221
    %v1223 = vxor.u32 %v1118, 2147483648
    %v1224 = vmul.f32 %v1223, 1.442695
    %v1225 = vpow.pop %v1224
    %v1226 = vadd.f32 %v1225, 1.0
    %v1227 = vrcp.pop %v1226
    %v1228 = vmul.f32 1.0, %v1227
    %v1229 = vtanh.pop %v1119
    %v1231 = vrot.slane %v1210, 7
    %v1233 = vmul.f32 %v1222, %v1231
    %v1234 = vmul.f32 %v1216, %v1229
    %v1235 = vadd.f32 %v1233, %v1234
    %v1236 = vtanh.pop %v951
    %v1238 = vrot.slane %v1236, 7
    %v1240 = vmul.f32 %v1228, %v1238
    %s1241 = sadd.s32 %s79, 4
    %s1242 = sld [smem:[#allocation4 + %s1241]]
    %v1244 = vrot.slane %v1240, 3
    %1246 = vmatprep.subr.mxu0 %v82
    %1247 = vmatpush1.msra.mxu0 %v81
    %1248 = vmatprep.subr.mxu0 %v86
    %1249 = vmatpush1.msra.mxu0 %v85
    %1250 = vmatprep.subr.mxu0 %v90
    %1251 = vmatpush1.msra.mxu0 %v89
    %1252 = vmatprep.subr.mxu0 %v94
    %1253 = vmatpush1.msra.mxu0 %v93
    %1254 = vmatprep.subr.mxu0 %v98
    %1255 = vmatpush1.msra.mxu0 %v97
    %1256 = vmatprep.subr.mxu0 %v102
    %1257 = vmatpush1.msra.mxu0 %v101
    %1258 = vmatprep.subr.mxu0 %v106
    %1259 = vmatpush1.msra.mxu0 %v105
    %1260 = vmatprep.subr.mxu0 %v110
    %1261 = vmatpush1.msra.mxu0 %v109
    %1262 = vmatprep.subr.mxu0 %v114
    %1263 = vmatpush1.msra.mxu0 %v113
    %1264 = vmatprep.subr.mxu0 %v118
    %1265 = vmatpush1.msra.mxu0 %v117
    %1266 = vmatprep.subr.mxu0 %v122
    %1267 = vmatpush1.msra.mxu0 %v121
    %1268 = vmatprep.subr.mxu0 %v126
    %1269 = vmatpush1.msra.mxu0 %v125
    %1270 = vmatprep.subr.mxu0 %v130
    %1271 = vmatpush1.msra.mxu0 %v129
    %1272 = vmatprep.subr.mxu0 %v134
    %1273 = vmatpush1.msra.mxu0 %v133
    %1274 = vmatprep.subr.mxu0 %v138
    %1275 = vmatpush1.msra.mxu0 %v137
    %1276 = vmatprep.subr.mxu0 %v142
    %1277 = vmatpush1.msra.mxu0 %v141
    %1278 = vmatprep.subr.mxu0 0.0
    %1279 = vmatpush1.msra.mxu0 0.0
    %1280 = vmatprep.subr.mxu0 0.0
    %1281 = vmatpush1.msra.mxu0 0.0
    %1282 = vmatprep.subr.mxu0 0.0
    %1283 = vmatpush1.msra.mxu0 0.0
    %1284 = vmatprep.subr.mxu0 0.0
    %1285 = vmatpush1.msra.mxu0 0.0
    %1286 = vmatprep.subr.mxu0 0.0
    %1287 = vmatpush1.msra.mxu0 0.0
    %1288 = vmatprep.subr.mxu0 0.0
    %1289 = vmatpush1.msra.mxu0 0.0
    %1290 = vmatprep.subr.mxu0 0.0
    %1291 = vmatpush1.msra.mxu0 0.0
    %1292 = vmatprep.subr.mxu0 0.0
    %1293 = vmatpush1.msra.mxu0 0.0
    %1294 = vmatprep.subr.mxu0 0.0
    %1295 = vmatpush1.msra.mxu0 0.0
    %1296 = vmatprep.subr.mxu0 0.0
    %1297 = vmatpush1.msra.mxu0 0.0
    %1298 = vmatprep.subr.mxu0 0.0
    %1299 = vmatpush1.msra.mxu0 0.0
    %1300 = vmatprep.subr.mxu0 0.0
    %1301 = vmatpush1.msra.mxu0 0.0
    %1302 = vmatprep.subr.mxu0 0.0
    %1303 = vmatpush1.msra.mxu0 0.0
    %1304 = vmatprep.subr.mxu0 0.0
    %1305 = vmatpush1.msra.mxu0 0.0
    %1306 = vmatprep.subr.mxu0 0.0
    %1307 = vmatpush1.msra.mxu0 0.0
    %1308 = vmatprep.subr.mxu0 0.0
    %1309 = vmatpush1.msra.mxu0 0.0
    %1310 = vmatprep.mubr.f32.mxu0 0.0
    %1311 = vmatmul.mubr.f32.gmra.mrb[0].mxu0 %v1244
    %v1312 = vpop.f32.mrb[0].mxu0
    %v1313 = vadd.f32 0.0, %v1312
    %v1314 = vpop.f32.mrb[0].mxu0
    %v1315 = vadd.f32 0.0, %v1314
    %1316 = vdwg.mxu0
    %1317 = vmatprep.subr.mxu0 %v84
    %1318 = vmatpush1.msra.mxu0 %v83
    %1319 = vmatprep.subr.mxu0 %v88
    %1320 = vmatpush1.msra.mxu0 %v87
    %1321 = vmatprep.subr.mxu0 %v92
    %1322 = vmatpush1.msra.mxu0 %v91
    %1323 = vmatprep.subr.mxu0 %v96
    %1324 = vmatpush1.msra.mxu0 %v95
    %1325 = vmatprep.subr.mxu0 %v100
    %1326 = vmatpush1.msra.mxu0 %v99
    %1327 = vmatprep.subr.mxu0 %v104
    %1328 = vmatpush1.msra.mxu0 %v103
    %1329 = vmatprep.subr.mxu0 %v108
    %1330 = vmatpush1.msra.mxu0 %v107
    %1331 = vmatprep.subr.mxu0 %v112
    %1332 = vmatpush1.msra.mxu0 %v111
    %1333 = vmatprep.subr.mxu0 %v116
    %1334 = vmatpush1.msra.mxu0 %v115
    %1335 = vmatprep.subr.mxu0 %v120
    %1336 = vmatpush1.msra.mxu0 %v119
    %1337 = vmatprep.subr.mxu0 %v124
    %1338 = vmatpush1.msra.mxu0 %v123
    %1339 = vmatprep.subr.mxu0 %v128
    %1340 = vmatpush1.msra.mxu0 %v127
    %1341 = vmatprep.subr.mxu0 %v132
    %1342 = vmatpush1.msra.mxu0 %v131
    %1343 = vmatprep.subr.mxu0 %v136
    %1344 = vmatpush1.msra.mxu0 %v135
    %1345 = vmatprep.subr.mxu0 %v140
    %1346 = vmatpush1.msra.mxu0 %v139
    %1347 = vmatprep.subr.mxu0 %v144
    %1348 = vmatpush1.msra.mxu0 %v143
    %1349 = vmatprep.subr.mxu0 0.0
    %1350 = vmatpush1.msra.mxu0 0.0
    %1351 = vmatprep.subr.mxu0 0.0
    %1352 = vmatpush1.msra.mxu0 0.0
    %1353 = vmatprep.subr.mxu0 0.0
    %1354 = vmatpush1.msra.mxu0 0.0
    %1355 = vmatprep.subr.mxu0 0.0
    %1356 = vmatpush1.msra.mxu0 0.0
    %1357 = vmatprep.subr.mxu0 0.0
    %1358 = vmatpush1.msra.mxu0 0.0
    %1359 = vmatprep.subr.mxu0 0.0
    %1360 = vmatpush1.msra.mxu0 0.0
    %1361 = vmatprep.subr.mxu0 0.0
    %1362 = vmatpush1.msra.mxu0 0.0
    %1363 = vmatprep.subr.mxu0 0.0
    %1364 = vmatpush1.msra.mxu0 0.0
    %1365 = vmatprep.subr.mxu0 0.0
    %1366 = vmatpush1.msra.mxu0 0.0
    %1367 = vmatprep.subr.mxu0 0.0
    %1368 = vmatpush1.msra.mxu0 0.0
    %1369 = vmatprep.subr.mxu0 0.0
    %1370 = vmatpush1.msra.mxu0 0.0
    %1371 = vmatprep.subr.mxu0 0.0
    %1372 = vmatpush1.msra.mxu0 0.0
    %1373 = vmatprep.subr.mxu0 0.0
    %1374 = vmatpush1.msra.mxu0 0.0
    %1375 = vmatprep.subr.mxu0 0.0
    %1376 = vmatpush1.msra.mxu0 0.0
    %1377 = vmatprep.subr.mxu0 0.0
    %1378 = vmatpush1.msra.mxu0 0.0
    %1379 = vmatprep.subr.mxu0 0.0
    %1380 = vmatpush1.msra.mxu0 0.0
    %1381 = vmatprep.mubr.f32.mxu0 0.0
    %1382 = vmatmul.mubr.f32.gmra.mrb[0].mxu0 %v1244
    %v1383 = vpop.f32.mrb[0].mxu0
    %v1384 = vadd.f32 0.0, %v1383
    %v1385 = vpop.f32.mrb[0].mxu0
    %v1386 = vadd.f32 0.0, %v1385
    %1387 = vdwg.mxu0
    %v1392 = vrot.slane %v1313, 4
    %v1393 = vrot.slane %v1315, 4
    %v1394 = vrot.slane %v1384, 4
    %v1395 = vrot.slane %v1386, 4
    %v1400 = vadd.f32 %v74, %v1392
    %v1401 = vadd.f32 %v75, %v1393
    %v1402 = vadd.f32 %v76, %v1394
    %v1403 = vadd.f32 %v77, %v1395
    %v1405 = vrot.slane %v1235, 3
    %1407 = vmatprep.subr.mxu0 0.0
    %1408 = vmatpush1.msra.mxu0 %v291
    %1409 = vmatprep.subr.mxu0 0.0
    %1410 = vmatpush1.msra.mxu0 %v292
    %1411 = vmatprep.subr.mxu0 0.0
    %1412 = vmatpush1.msra.mxu0 %v293
    %1413 = vmatprep.subr.mxu0 0.0
    %1414 = vmatpush1.msra.mxu0 %v294
    %1415 = vmatprep.subr.mxu0 0.0
    %1416 = vmatpush1.msra.mxu0 %v295
    %1417 = vmatprep.subr.mxu0 0.0
    %1418 = vmatpush1.msra.mxu0 %v296
    %1419 = vmatprep.subr.mxu0 0.0
    %1420 = vmatpush1.msra.mxu0 %v297
    %1421 = vmatprep.subr.mxu0 0.0
    %1422 = vmatpush1.msra.mxu0 %v298
    %1423 = vmatprep.subr.mxu0 0.0
    %1424 = vmatpush1.msra.mxu0 %v299
    %1425 = vmatprep.subr.mxu0 0.0
    %1426 = vmatpush1.msra.mxu0 %v300
    %1427 = vmatprep.subr.mxu0 0.0
    %1428 = vmatpush1.msra.mxu0 %v301
    %1429 = vmatprep.subr.mxu0 0.0
    %1430 = vmatpush1.msra.mxu0 %v302
    %1431 = vmatprep.subr.mxu0 0.0
    %1432 = vmatpush1.msra.mxu0 %v303
    %1433 = vmatprep.subr.mxu0 0.0
    %1434 = vmatpush1.msra.mxu0 %v304
    %1435 = vmatprep.subr.mxu0 0.0
    %1436 = vmatpush1.msra.mxu0 %v305
    %1437 = vmatprep.subr.mxu0 0.0
    %1438 = vmatpush1.msra.mxu0 %v306
    %1439 = vmatprep.subr.mxu0 0.0
    %1440 = vmatpush1.msra.mxu0 0.0
    %1441 = vmatprep.subr.mxu0 0.0
    %1442 = vmatpush1.msra.mxu0 0.0
    %1443 = vmatprep.subr.mxu0 0.0
    %1444 = vmatpush1.msra.mxu0 0.0
    %1445 = vmatprep.subr.mxu0 0.0
    %1446 = vmatpush1.msra.mxu0 0.0
    %1447 = vmatprep.subr.mxu0 0.0
    %1448 = vmatpush1.msra.mxu0 0.0
    %1449 = vmatprep.subr.mxu0 0.0
    %1450 = vmatpush1.msra.mxu0 0.0
    %1451 = vmatprep.subr.mxu0 0.0
    %1452 = vmatpush1.msra.mxu0 0.0
    %1453 = vmatprep.subr.mxu0 0.0
    %1454 = vmatpush1.msra.mxu0 0.0
    %1455 = vmatprep.subr.mxu0 0.0
    %1456 = vmatpush1.msra.mxu0 0.0
    %1457 = vmatprep.subr.mxu0 0.0
    %1458 = vmatpush1.msra.mxu0 0.0
    %1459 = vmatprep.subr.mxu0 0.0
    %1460 = vmatpush1.msra.mxu0 0.0
    %1461 = vmatprep.subr.mxu0 0.0
    %1462 = vmatpush1.msra.mxu0 0.0
    %1463 = vmatprep.subr.mxu0 0.0
    %1464 = vmatpush1.msra.mxu0 0.0
    %1465 = vmatprep.subr.mxu0 0.0
    %1466 = vmatpush1.msra.mxu0 0.0
    %1467 = vmatprep.subr.mxu0 0.0
    %1468 = vmatpush1.msra.mxu0 0.0
    %1469 = vmatprep.subr.mxu0 0.0
    %1470 = vmatpush1.msra.mxu0 0.0
    %1471 = vmatprep.mubr.f32.mxu0 0.0
    %1472 = vmatmul.mubr.f32.gmra.mrb[0].mxu0 %v1405
    %v1473 = vpop.f32.mrb[0].mxu0
    %v1474 = vadd.f32 0.0, %v1473
    %v1475 = vpop.f32.mrb[0].mxu0
    %1476 = vdwg.mxu0
    %v1477 = vadd.f32 %v68, %v1474
    %v1478 = vtanh.pop %v1477
    %v1480 = vlaneseq
    %v1481 = vshrl.u32 %v1480, 7
    %v1482 = vsub.s32 0, %v1481
    %v1483 = vrot.slane %v1478, %v1482
    %v1485 = vsub.f32 %v1235, %v1483
    %v1486 = vstv %s1242
    %v1487 = vmul.f32 %v1478, %v1486
    %v1489 = vlaneseq
    %v1490 = vshrl.u32 %v1489, 7
    %v1491 = vsub.s32 0, %v1490
    %v1492 = vrot.slane %v1487, %v1491
    %v1494 = vadd.f32 %v1485, %v1492
    %v1495 = vxor.u32 %v1400, 2147483648
    %v1496 = vmul.f32 %v1495, 1.442695
    %v1497 = vpow.pop %v1496
    %v1498 = vadd.f32 %v1497, 1.0
    %v1499 = vrcp.pop %v1498
    %v1500 = vmul.f32 1.0, %v1499
    %v1501 = vxor.u32 %v1401, 2147483648
    %v1502 = vmul.f32 %v1501, 1.442695
    %v1503 = vpow.pop %v1502
    %v1504 = vadd.f32 %v1503, 1.0
    %v1505 = vrcp.pop %v1504
    %v1506 = vmul.f32 1.0, %v1505
    %v1507 = vxor.u32 %v1402, 2147483648
    %v1508 = vmul.f32 %v1507, 1.442695
    %v1509 = vpow.pop %v1508
    %v1510 = vadd.f32 %v1509, 1.0
    %v1511 = vrcp.pop %v1510
    %v1512 = vmul.f32 1.0, %v1511
    %v1513 = vtanh.pop %v1403
    %v1515 = vrot.slane %v1494, 7
    %v1517 = vmul.f32 %v1506, %v1515
    %v1518 = vmul.f32 %v1500, %v1513
    %v1519 = vadd.f32 %v1517, %v1518
    %v1520 = vtanh.pop %v1235
    %v1522 = vrot.slane %v1520, 7
    %v1524 = vmul.f32 %v1512, %v1522
    %s1525 = sadd.s32 %s79, 5
    %s1526 = sld [smem:[#allocation4 + %s1525]]
    %v1528 = vrot.slane %v1524, 4
    %1530 = vmatprep.subr.mxu0 %v82
    %1531 = vmatpush1.msra.mxu0 %v81
    %1532 = vmatprep.subr.mxu0 %v86
    %1533 = vmatpush1.msra.mxu0 %v85
    %1534 = vmatprep.subr.mxu0 %v90
    %1535 = vmatpush1.msra.mxu0 %v89
    %1536 = vmatprep.subr.mxu0 %v94
    %1537 = vmatpush1.msra.mxu0 %v93
    %1538 = vmatprep.subr.mxu0 %v98
    %1539 = vmatpush1.msra.mxu0 %v97
    %1540 = vmatprep.subr.mxu0 %v102
    %1541 = vmatpush1.msra.mxu0 %v101
    %1542 = vmatprep.subr.mxu0 %v106
    %1543 = vmatpush1.msra.mxu0 %v105
    %1544 = vmatprep.subr.mxu0 %v110
    %1545 = vmatpush1.msra.mxu0 %v109
    %1546 = vmatprep.subr.mxu0 %v114
    %1547 = vmatpush1.msra.mxu0 %v113
    %1548 = vmatprep.subr.mxu0 %v118
    %1549 = vmatpush1.msra.mxu0 %v117
    %1550 = vmatprep.subr.mxu0 %v122
    %1551 = vmatpush1.msra.mxu0 %v121
    %1552 = vmatprep.subr.mxu0 %v126
    %1553 = vmatpush1.msra.mxu0 %v125
    %1554 = vmatprep.subr.mxu0 %v130
    %1555 = vmatpush1.msra.mxu0 %v129
    %1556 = vmatprep.subr.mxu0 %v134
    %1557 = vmatpush1.msra.mxu0 %v133
    %1558 = vmatprep.subr.mxu0 %v138
    %1559 = vmatpush1.msra.mxu0 %v137
    %1560 = vmatprep.subr.mxu0 %v142
    %1561 = vmatpush1.msra.mxu0 %v141
    %1562 = vmatprep.subr.mxu0 0.0
    %1563 = vmatpush1.msra.mxu0 0.0
    %1564 = vmatprep.subr.mxu0 0.0
    %1565 = vmatpush1.msra.mxu0 0.0
    %1566 = vmatprep.subr.mxu0 0.0
    %1567 = vmatpush1.msra.mxu0 0.0
    %1568 = vmatprep.subr.mxu0 0.0
    %1569 = vmatpush1.msra.mxu0 0.0
    %1570 = vmatprep.subr.mxu0 0.0
    %1571 = vmatpush1.msra.mxu0 0.0
    %1572 = vmatprep.subr.mxu0 0.0
    %1573 = vmatpush1.msra.mxu0 0.0
    %1574 = vmatprep.subr.mxu0 0.0
    %1575 = vmatpush1.msra.mxu0 0.0
    %1576 = vmatprep.subr.mxu0 0.0
    %1577 = vmatpush1.msra.mxu0 0.0
    %1578 = vmatprep.subr.mxu0 0.0
    %1579 = vmatpush1.msra.mxu0 0.0
    %1580 = vmatprep.subr.mxu0 0.0
    %1581 = vmatpush1.msra.mxu0 0.0
    %1582 = vmatprep.subr.mxu0 0.0
    %1583 = vmatpush1.msra.mxu0 0.0
    %1584 = vmatprep.subr.mxu0 0.0
    %1585 = vmatpush1.msra.mxu0 0.0
    %1586 = vmatprep.subr.mxu0 0.0
    %1587 = vmatpush1.msra.mxu0 0.0
    %1588 = vmatprep.subr.mxu0 0.0
    %1589 = vmatpush1.msra.mxu0 0.0
    %1590 = vmatprep.subr.mxu0 0.0
    %1591 = vmatpush1.msra.mxu0 0.0
    %1592 = vmatprep.subr.mxu0 0.0
    %1593 = vmatpush1.msra.mxu0 0.0
    %1594 = vmatprep.mubr.f32.mxu0 0.0
    %1595 = vmatmul.mubr.f32.gmra.mrb[0].mxu0 %v1528
    %v1596 = vpop.f32.mrb[0].mxu0
    %v1597 = vadd.f32 0.0, %v1596
    %v1598 = vpop.f32.mrb[0].mxu0
    %v1599 = vadd.f32 0.0, %v1598
    %1600 = vdwg.mxu0
    %1601 = vmatprep.subr.mxu0 %v84
    %1602 = vmatpush1.msra.mxu0 %v83
    %1603 = vmatprep.subr.mxu0 %v88
    %1604 = vmatpush1.msra.mxu0 %v87
    %1605 = vmatprep.subr.mxu0 %v92
    %1606 = vmatpush1.msra.mxu0 %v91
    %1607 = vmatprep.subr.mxu0 %v96
    %1608 = vmatpush1.msra.mxu0 %v95
    %1609 = vmatprep.subr.mxu0 %v100
    %1610 = vmatpush1.msra.mxu0 %v99
    %1611 = vmatprep.subr.mxu0 %v104
    %1612 = vmatpush1.msra.mxu0 %v103
    %1613 = vmatprep.subr.mxu0 %v108
    %1614 = vmatpush1.msra.mxu0 %v107
    %1615 = vmatprep.subr.mxu0 %v112
    %1616 = vmatpush1.msra.mxu0 %v111
    %1617 = vmatprep.subr.mxu0 %v116
    %1618 = vmatpush1.msra.mxu0 %v115
    %1619 = vmatprep.subr.mxu0 %v120
    %1620 = vmatpush1.msra.mxu0 %v119
    %1621 = vmatprep.subr.mxu0 %v124
    %1622 = vmatpush1.msra.mxu0 %v123
    %1623 = vmatprep.subr.mxu0 %v128
    %1624 = vmatpush1.msra.mxu0 %v127
    %1625 = vmatprep.subr.mxu0 %v132
    %1626 = vmatpush1.msra.mxu0 %v131
    %1627 = vmatprep.subr.mxu0 %v136
    %1628 = vmatpush1.msra.mxu0 %v135
    %1629 = vmatprep.subr.mxu0 %v140
    %1630 = vmatpush1.msra.mxu0 %v139
    %1631 = vmatprep.subr.mxu0 %v144
    %1632 = vmatpush1.msra.mxu0 %v143
    %1633 = vmatprep.subr.mxu0 0.0
    %1634 = vmatpush1.msra.mxu0 0.0
    %1635 = vmatprep.subr.mxu0 0.0
    %1636 = vmatpush1.msra.mxu0 0.0
    %1637 = vmatprep.subr.mxu0 0.0
    %1638 = vmatpush1.msra.mxu0 0.0
    %1639 = vmatprep.subr.mxu0 0.0
    %1640 = vmatpush1.msra.mxu0 0.0
    %1641 = vmatprep.subr.mxu0 0.0
    %1642 = vmatpush1.msra.mxu0 0.0
    %1643 = vmatprep.subr.mxu0 0.0
    %1644 = vmatpush1.msra.mxu0 0.0
    %1645 = vmatprep.subr.mxu0 0.0
    %1646 = vmatpush1.msra.mxu0 0.0
    %1647 = vmatprep.subr.mxu0 0.0
    %1648 = vmatpush1.msra.mxu0 0.0
    %1649 = vmatprep.subr.mxu0 0.0
    %1650 = vmatpush1.msra.mxu0 0.0
    %1651 = vmatprep.subr.mxu0 0.0
    %1652 = vmatpush1.msra.mxu0 0.0
    %1653 = vmatprep.subr.mxu0 0.0
    %1654 = vmatpush1.msra.mxu0 0.0
    %1655 = vmatprep.subr.mxu0 0.0
    %1656 = vmatpush1.msra.mxu0 0.0
    %1657 = vmatprep.subr.mxu0 0.0
    %1658 = vmatpush1.msra.mxu0 0.0
    %1659 = vmatprep.subr.mxu0 0.0
    %1660 = vmatpush1.msra.mxu0 0.0
    %1661 = vmatprep.subr.mxu0 0.0
    %1662 = vmatpush1.msra.mxu0 0.0
    %1663 = vmatprep.subr.mxu0 0.0
    %1664 = vmatpush1.msra.mxu0 0.0
    %1665 = vmatprep.mubr.f32.mxu0 0.0
    %1666 = vmatmul.mubr.f32.gmra.mrb[0].mxu0 %v1528
    %v1667 = vpop.f32.mrb[0].mxu0
    %v1668 = vadd.f32 0.0, %v1667
    %v1669 = vpop.f32.mrb[0].mxu0
    %v1670 = vadd.f32 0.0, %v1669
    %1671 = vdwg.mxu0
    %v1676 = vrot.slane %v1597, 3
    %v1677 = vrot.slane %v1599, 3
    %v1678 = vrot.slane %v1668, 3
    %v1679 = vrot.slane %v1670, 3
    %v1684 = vadd.f32 %v74, %v1676
    %v1685 = vadd.f32 %v75, %v1677
    %v1686 = vadd.f32 %v76, %v1678
    %v1687 = vadd.f32 %v77, %v1679
    %v1689 = vrot.slane %v1519, 4
    %1691 = vmatprep.subr.mxu0 0.0
    %1692 = vmatpush1.msra.mxu0 %v291
    %1693 = vmatprep.subr.mxu0 0.0
    %1694 = vmatpush1.msra.mxu0 %v292
    %1695 = vmatprep.subr.mxu0 0.0
    %1696 = vmatpush1.msra.mxu0 %v293
    %1697 = vmatprep.subr.mxu0 0.0
    %1698 = vmatpush1.msra.mxu0 %v294
    %1699 = vmatprep.subr.mxu0 0.0
    %1700 = vmatpush1.msra.mxu0 %v295
    %1701 = vmatprep.subr.mxu0 0.0
    %1702 = vmatpush1.msra.mxu0 %v296
    %1703 = vmatprep.subr.mxu0 0.0
    %1704 = vmatpush1.msra.mxu0 %v297
    %1705 = vmatprep.subr.mxu0 0.0
    %1706 = vmatpush1.msra.mxu0 %v298
    %1707 = vmatprep.subr.mxu0 0.0
    %1708 = vmatpush1.msra.mxu0 %v299
    %1709 = vmatprep.subr.mxu0 0.0
    %1710 = vmatpush1.msra.mxu0 %v300
    %1711 = vmatprep.subr.mxu0 0.0
    %1712 = vmatpush1.msra.mxu0 %v301
    %1713 = vmatprep.subr.mxu0 0.0
    %1714 = vmatpush1.msra.mxu0 %v302
    %1715 = vmatprep.subr.mxu0 0.0
    %1716 = vmatpush1.msra.mxu0 %v303
    %1717 = vmatprep.subr.mxu0 0.0
    %1718 = vmatpush1.msra.mxu0 %v304
    %1719 = vmatprep.subr.mxu0 0.0
    %1720 = vmatpush1.msra.mxu0 %v305
    %1721 = vmatprep.subr.mxu0 0.0
    %1722 = vmatpush1.msra.mxu0 %v306
    %1723 = vmatprep.subr.mxu0 0.0
    %1724 = vmatpush1.msra.mxu0 0.0
    %1725 = vmatprep.subr.mxu0 0.0
    %1726 = vmatpush1.msra.mxu0 0.0
    %1727 = vmatprep.subr.mxu0 0.0
    %1728 = vmatpush1.msra.mxu0 0.0
    %1729 = vmatprep.subr.mxu0 0.0
    %1730 = vmatpush1.msra.mxu0 0.0
    %1731 = vmatprep.subr.mxu0 0.0
    %1732 = vmatpush1.msra.mxu0 0.0
    %1733 = vmatprep.subr.mxu0 0.0
    %1734 = vmatpush1.msra.mxu0 0.0
    %1735 = vmatprep.subr.mxu0 0.0
    %1736 = vmatpush1.msra.mxu0 0.0
    %1737 = vmatprep.subr.mxu0 0.0
    %1738 = vmatpush1.msra.mxu0 0.0
    %1739 = vmatprep.subr.mxu0 0.0
    %1740 = vmatpush1.msra.mxu0 0.0
    %1741 = vmatprep.subr.mxu0 0.0
    %1742 = vmatpush1.msra.mxu0 0.0
    %1743 = vmatprep.subr.mxu0 0.0
    %1744 = vmatpush1.msra.mxu0 0.0
    %1745 = vmatprep.subr.mxu0 0.0
    %1746 = vmatpush1.msra.mxu0 0.0
    %1747 = vmatprep.subr.mxu0 0.0
    %1748 = vmatpush1.msra.mxu0 0.0
    %1749 = vmatprep.subr.mxu0 0.0
    %1750 = vmatpush1.msra.mxu0 0.0
    %1751 = vmatprep.subr.mxu0 0.0
    %1752 = vmatpush1.msra.mxu0 0.0
    %1753 = vmatprep.subr.mxu0 0.0
    %1754 = vmatpush1.msra.mxu0 0.0
    %1755 = vmatprep.mubr.f32.mxu0 0.0
    %1756 = vmatmul.mubr.f32.gmra.mrb[0].mxu0 %v1689
    %v1757 = vpop.f32.mrb[0].mxu0
    %v1758 = vadd.f32 0.0, %v1757
    %v1759 = vpop.f32.mrb[0].mxu0
    %1760 = vdwg.mxu0
    %v1761 = vadd.f32 %v68, %v1758
    %v1762 = vtanh.pop %v1761
    %v1764 = vlaneseq
    %v1765 = vshrl.u32 %v1764, 7
    %v1766 = vsub.s32 0, %v1765
    %v1767 = vrot.slane %v1762, %v1766
    %v1769 = vsub.f32 %v1519, %v1767
    %v1770 = vstv %s1526
    %v1771 = vmul.f32 %v1762, %v1770
    %v1773 = vlaneseq
    %v1774 = vshrl.u32 %v1773, 7
    %v1775 = vsub.s32 0, %v1774
    %v1776 = vrot.slane %v1771, %v1775
    %v1778 = vadd.f32 %v1769, %v1776
    %v1779 = vxor.u32 %v1684, 2147483648
    %v1780 = vmul.f32 %v1779, 1.442695
    %v1781 = vpow.pop %v1780
    %v1782 = vadd.f32 %v1781, 1.0
    %v1783 = vrcp.pop %v1782
    %v1784 = vmul.f32 1.0, %v1783
    %v1785 = vxor.u32 %v1685, 2147483648
    %v1786 = vmul.f32 %v1785, 1.442695
    %v1787 = vpow.pop %v1786
    %v1788 = vadd.f32 %v1787, 1.0
    %v1789 = vrcp.pop %v1788
    %v1790 = vmul.f32 1.0, %v1789
    %v1791 = vxor.u32 %v1686, 2147483648
    %v1792 = vmul.f32 %v1791, 1.442695
    %v1793 = vpow.pop %v1792
    %v1794 = vadd.f32 %v1793, 1.0
    %v1795 = vrcp.pop %v1794
    %v1796 = vmul.f32 1.0, %v1795
    %v1797 = vtanh.pop %v1687
    %v1799 = vrot.slane %v1778, 7
    %v1801 = vmul.f32 %v1790, %v1799
    %v1802 = vmul.f32 %v1784, %v1797
    %v1803 = vadd.f32 %v1801, %v1802
    %v1804 = vtanh.pop %v1519
    %v1806 = vrot.slane %v1804, 7
    %v1808 = vmul.f32 %v1796, %v1806
    %s1809 = sadd.s32 %s79, 6
    %s1810 = sld [smem:[#allocation4 + %s1809]]
    %v1812 = vrot.slane %v1808, 5
    %1814 = vmatprep.subr.mxu0 %v82
    %1815 = vmatpush1.msra.mxu0 %v81
    %1816 = vmatprep.subr.mxu0 %v86
    %1817 = vmatpush1.msra.mxu0 %v85
    %1818 = vmatprep.subr.mxu0 %v90
    %1819 = vmatpush1.msra.mxu0 %v89
    %1820 = vmatprep.subr.mxu0 %v94
    %1821 = vmatpush1.msra.mxu0 %v93
    %1822 = vmatprep.subr.mxu0 %v98
    %1823 = vmatpush1.msra.mxu0 %v97
    %1824 = vmatprep.subr.mxu0 %v102
    %1825 = vmatpush1.msra.mxu0 %v101
    %1826 = vmatprep.subr.mxu0 %v106
    %1827 = vmatpush1.msra.mxu0 %v105
    %1828 = vmatprep.subr.mxu0 %v110
    %1829 = vmatpush1.msra.mxu0 %v109
    %1830 = vmatprep.subr.mxu0 %v114
    %1831 = vmatpush1.msra.mxu0 %v113
    %1832 = vmatprep.subr.mxu0 %v118
    %1833 = vmatpush1.msra.mxu0 %v117
    %1834 = vmatprep.subr.mxu0 %v122
    %1835 = vmatpush1.msra.mxu0 %v121
    %1836 = vmatprep.subr.mxu0 %v126
    %1837 = vmatpush1.msra.mxu0 %v125
    %1838 = vmatprep.subr.mxu0 %v130
    %1839 = vmatpush1.msra.mxu0 %v129
    %1840 = vmatprep.subr.mxu0 %v134
    %1841 = vmatpush1.msra.mxu0 %v133
    %1842 = vmatprep.subr.mxu0 %v138
    %1843 = vmatpush1.msra.mxu0 %v137
    %1844 = vmatprep.subr.mxu0 %v142
    %1845 = vmatpush1.msra.mxu0 %v141
    %1846 = vmatprep.subr.mxu0 0.0
    %1847 = vmatpush1.msra.mxu0 0.0
    %1848 = vmatprep.subr.mxu0 0.0
    %1849 = vmatpush1.msra.mxu0 0.0
    %1850 = vmatprep.subr.mxu0 0.0
    %1851 = vmatpush1.msra.mxu0 0.0
    %1852 = vmatprep.subr.mxu0 0.0
    %1853 = vmatpush1.msra.mxu0 0.0
    %1854 = vmatprep.subr.mxu0 0.0
    %1855 = vmatpush1.msra.mxu0 0.0
    %1856 = vmatprep.subr.mxu0 0.0
    %1857 = vmatpush1.msra.mxu0 0.0
    %1858 = vmatprep.subr.mxu0 0.0
    %1859 = vmatpush1.msra.mxu0 0.0
    %1860 = vmatprep.subr.mxu0 0.0
    %1861 = vmatpush1.msra.mxu0 0.0
    %1862 = vmatprep.subr.mxu0 0.0
    %1863 = vmatpush1.msra.mxu0 0.0
    %1864 = vmatprep.subr.mxu0 0.0
    %1865 = vmatpush1.msra.mxu0 0.0
    %1866 = vmatprep.subr.mxu0 0.0
    %1867 = vmatpush1.msra.mxu0 0.0
    %1868 = vmatprep.subr.mxu0 0.0
    %1869 = vmatpush1.msra.mxu0 0.0
    %1870 = vmatprep.subr.mxu0 0.0
    %1871 = vmatpush1.msra.mxu0 0.0
    %1872 = vmatprep.subr.mxu0 0.0
    %1873 = vmatpush1.msra.mxu0 0.0
    %1874 = vmatprep.subr.mxu0 0.0
    %1875 = vmatpush1.msra.mxu0 0.0
    %1876 = vmatprep.subr.mxu0 0.0
    %1877 = vmatpush1.msra.mxu0 0.0
    %1878 = vmatprep.mubr.f32.mxu0 0.0
    %1879 = vmatmul.mubr.f32.gmra.mrb[0].mxu0 %v1812
    %v1880 = vpop.f32.mrb[0].mxu0
    %v1881 = vadd.f32 0.0, %v1880
    %v1882 = vpop.f32.mrb[0].mxu0
    %v1883 = vadd.f32 0.0, %v1882
    %1884 = vdwg.mxu0
    %1885 = vmatprep.subr.mxu0 %v84
    %1886 = vmatpush1.msra.mxu0 %v83
    %1887 = vmatprep.subr.mxu0 %v88
    %1888 = vmatpush1.msra.mxu0 %v87
    %1889 = vmatprep.subr.mxu0 %v92
    %1890 = vmatpush1.msra.mxu0 %v91
    %1891 = vmatprep.subr.mxu0 %v96
    %1892 = vmatpush1.msra.mxu0 %v95
    %1893 = vmatprep.subr.mxu0 %v100
    %1894 = vmatpush1.msra.mxu0 %v99
    %1895 = vmatprep.subr.mxu0 %v104
    %1896 = vmatpush1.msra.mxu0 %v103
    %1897 = vmatprep.subr.mxu0 %v108
    %1898 = vmatpush1.msra.mxu0 %v107
    %1899 = vmatprep.subr.mxu0 %v112
    %1900 = vmatpush1.msra.mxu0 %v111
    %1901 = vmatprep.subr.mxu0 %v116
    %1902 = vmatpush1.msra.mxu0 %v115
    %1903 = vmatprep.subr.mxu0 %v120
    %1904 = vmatpush1.msra.mxu0 %v119
    %1905 = vmatprep.subr.mxu0 %v124
    %1906 = vmatpush1.msra.mxu0 %v123
    %1907 = vmatprep.subr.mxu0 %v128
    %1908 = vmatpush1.msra.mxu0 %v127
    %1909 = vmatprep.subr.mxu0 %v132
    %1910 = vmatpush1.msra.mxu0 %v131
    %1911 = vmatprep.subr.mxu0 %v136
    %1912 = vmatpush1.msra.mxu0 %v135
    %1913 = vmatprep.subr.mxu0 %v140
    %1914 = vmatpush1.msra.mxu0 %v139
    %1915 = vmatprep.subr.mxu0 %v144
    %1916 = vmatpush1.msra.mxu0 %v143
    %1917 = vmatprep.subr.mxu0 0.0
    %1918 = vmatpush1.msra.mxu0 0.0
    %1919 = vmatprep.subr.mxu0 0.0
    %1920 = vmatpush1.msra.mxu0 0.0
    %1921 = vmatprep.subr.mxu0 0.0
    %1922 = vmatpush1.msra.mxu0 0.0
    %1923 = vmatprep.subr.mxu0 0.0
    %1924 = vmatpush1.msra.mxu0 0.0
    %1925 = vmatprep.subr.mxu0 0.0
    %1926 = vmatpush1.msra.mxu0 0.0
    %1927 = vmatprep.subr.mxu0 0.0
    %1928 = vmatpush1.msra.mxu0 0.0
    %1929 = vmatprep.subr.mxu0 0.0
    %1930 = vmatpush1.msra.mxu0 0.0
    %1931 = vmatprep.subr.mxu0 0.0
    %1932 = vmatpush1.msra.mxu0 0.0
    %1933 = vmatprep.subr.mxu0 0.0
    %1934 = vmatpush1.msra.mxu0 0.0
    %1935 = vmatprep.subr.mxu0 0.0
    %1936 = vmatpush1.msra.mxu0 0.0
    %1937 = vmatprep.subr.mxu0 0.0
    %1938 = vmatpush1.msra.mxu0 0.0
    %1939 = vmatprep.subr.mxu0 0.0
    %1940 = vmatpush1.msra.mxu0 0.0
    %1941 = vmatprep.subr.mxu0 0.0
    %1942 = vmatpush1.msra.mxu0 0.0
    %1943 = vmatprep.subr.mxu0 0.0
    %1944 = vmatpush1.msra.mxu0 0.0
    %1945 = vmatprep.subr.mxu0 0.0
    %1946 = vmatpush1.msra.mxu0 0.0
    %1947 = vmatprep.subr.mxu0 0.0
    %1948 = vmatpush1.msra.mxu0 0.0
    %1949 = vmatprep.mubr.f32.mxu0 0.0
    %1950 = vmatmul.mubr.f32.gmra.mrb[0].mxu0 %v1812
    %v1951 = vpop.f32.mrb[0].mxu0
    %v1952 = vadd.f32 0.0, %v1951
    %v1953 = vpop.f32.mrb[0].mxu0
    %v1954 = vadd.f32 0.0, %v1953
    %1955 = vdwg.mxu0
    %v1960 = vrot.slane %v1881, 2
    %v1961 = vrot.slane %v1883, 2
    %v1962 = vrot.slane %v1952, 2
    %v1963 = vrot.slane %v1954, 2
    %v1968 = vadd.f32 %v74, %v1960
    %v1969 = vadd.f32 %v75, %v1961
    %v1970 = vadd.f32 %v76, %v1962
    %v1971 = vadd.f32 %v77, %v1963
    %v1973 = vrot.slane %v1803, 5
    %1975 = vmatprep.subr.mxu0 0.0
    %1976 = vmatpush1.msra.mxu0 %v291
    %1977 = vmatprep.subr.mxu0 0.0
    %1978 = vmatpush1.msra.mxu0 %v292
    %1979 = vmatprep.subr.mxu0 0.0
    %1980 = vmatpush1.msra.mxu0 %v293
    %1981 = vmatprep.subr.mxu0 0.0
    %1982 = vmatpush1.msra.mxu0 %v294
    %1983 = vmatprep.subr.mxu0 0.0
    %1984 = vmatpush1.msra.mxu0 %v295
    %1985 = vmatprep.subr.mxu0 0.0
    %1986 = vmatpush1.msra.mxu0 %v296
    %1987 = vmatprep.subr.mxu0 0.0
    %1988 = vmatpush1.msra.mxu0 %v297
    %1989 = vmatprep.subr.mxu0 0.0
    %1990 = vmatpush1.msra.mxu0 %v298
    %1991 = vmatprep.subr.mxu0 0.0
    %1992 = vmatpush1.msra.mxu0 %v299
    %1993 = vmatprep.subr.mxu0 0.0
    %1994 = vmatpush1.msra.mxu0 %v300
    %1995 = vmatprep.subr.mxu0 0.0
    %1996 = vmatpush1.msra.mxu0 %v301
    %1997 = vmatprep.subr.mxu0 0.0
    %1998 = vmatpush1.msra.mxu0 %v302
    %1999 = vmatprep.subr.mxu0 0.0
    %2000 = vmatpush1.msra.mxu0 %v303
    %2001 = vmatprep.subr.mxu0 0.0
    %2002 = vmatpush1.msra.mxu0 %v304
    %2003 = vmatprep.subr.mxu0 0.0
    %2004 = vmatpush1.msra.mxu0 %v305
    %2005 = vmatprep.subr.mxu0 0.0
    %2006 = vmatpush1.msra.mxu0 %v306
    %2007 = vmatprep.subr.mxu0 0.0
    %2008 = vmatpush1.msra.mxu0 0.0
    %2009 = vmatprep.subr.mxu0 0.0
    %2010 = vmatpush1.msra.mxu0 0.0
    %2011 = vmatprep.subr.mxu0 0.0
    %2012 = vmatpush1.msra.mxu0 0.0
    %2013 = vmatprep.subr.mxu0 0.0
    %2014 = vmatpush1.msra.mxu0 0.0
    %2015 = vmatprep.subr.mxu0 0.0
    %2016 = vmatpush1.msra.mxu0 0.0
    %2017 = vmatprep.subr.mxu0 0.0
    %2018 = vmatpush1.msra.mxu0 0.0
    %2019 = vmatprep.subr.mxu0 0.0
    %2020 = vmatpush1.msra.mxu0 0.0
    %2021 = vmatprep.subr.mxu0 0.0
    %2022 = vmatpush1.msra.mxu0 0.0
    %2023 = vmatprep.subr.mxu0 0.0
    %2024 = vmatpush1.msra.mxu0 0.0
    %2025 = vmatprep.subr.mxu0 0.0
    %2026 = vmatpush1.msra.mxu0 0.0
    %2027 = vmatprep.subr.mxu0 0.0
    %2028 = vmatpush1.msra.mxu0 0.0
    %2029 = vmatprep.subr.mxu0 0.0
    %2030 = vmatpush1.msra.mxu0 0.0
    %2031 = vmatprep.subr.mxu0 0.0
    %2032 = vmatpush1.msra.mxu0 0.0
    %2033 = vmatprep.subr.mxu0 0.0
    %2034 = vmatpush1.msra.mxu0 0.0
    %2035 = vmatprep.subr.mxu0 0.0
    %2036 = vmatpush1.msra.mxu0 0.0
    %2037 = vmatprep.subr.mxu0 0.0
    %2038 = vmatpush1.msra.mxu0 0.0
    %2039 = vmatprep.mubr.f32.mxu0 0.0
    %2040 = vmatmul.mubr.f32.gmra.mrb[0].mxu0 %v1973
    %v2041 = vpop.f32.mrb[0].mxu0
    %v2042 = vadd.f32 0.0, %v2041
    %v2043 = vpop.f32.mrb[0].mxu0
    %2044 = vdwg.mxu0
    %v2045 = vadd.f32 %v68, %v2042
    %v2046 = vtanh.pop %v2045
    %v2048 = vlaneseq
    %v2049 = vshrl.u32 %v2048, 7
    %v2050 = vsub.s32 0, %v2049
    %v2051 = vrot.slane %v2046, %v2050
    %v2053 = vsub.f32 %v1803, %v2051
    %v2054 = vstv %s1810
    %v2055 = vmul.f32 %v2046, %v2054
    %v2057 = vlaneseq
    %v2058 = vshrl.u32 %v2057, 7
    %v2059 = vsub.s32 0, %v2058
    %v2060 = vrot.slane %v2055, %v2059
    %v2062 = vadd.f32 %v2053, %v2060
    %v2063 = vxor.u32 %v1968, 2147483648
    %v2064 = vmul.f32 %v2063, 1.442695
    %v2065 = vpow.pop %v2064
    %v2066 = vadd.f32 %v2065, 1.0
    %v2067 = vrcp.pop %v2066
    %v2068 = vmul.f32 1.0, %v2067
    %v2069 = vxor.u32 %v1969, 2147483648
    %v2070 = vmul.f32 %v2069, 1.442695
    %v2071 = vpow.pop %v2070
    %v2072 = vadd.f32 %v2071, 1.0
    %v2073 = vrcp.pop %v2072
    %v2074 = vmul.f32 1.0, %v2073
    %v2075 = vxor.u32 %v1970, 2147483648
    %v2076 = vmul.f32 %v2075, 1.442695
    %v2077 = vpow.pop %v2076
    %v2078 = vadd.f32 %v2077, 1.0
    %v2079 = vrcp.pop %v2078
    %v2080 = vmul.f32 1.0, %v2079
    %v2081 = vtanh.pop %v1971
    %v2083 = vrot.slane %v2062, 7
    %v2085 = vmul.f32 %v2074, %v2083
    %v2086 = vmul.f32 %v2068, %v2081
    %v2087 = vadd.f32 %v2085, %v2086
    %v2088 = vtanh.pop %v1803
    %v2090 = vrot.slane %v2088, 7
    %v2092 = vmul.f32 %v2080, %v2090
    %s2093 = sadd.s32 %s79, 7
    %s2094 = sld [smem:[#allocation4 + %s2093]]
    %v2096 = vrot.slane %v2092, 6
    %2098 = vmatprep.subr.mxu0 %v82
    %2099 = vmatpush1.msra.mxu0 %v81
    %2100 = vmatprep.subr.mxu0 %v86
    %2101 = vmatpush1.msra.mxu0 %v85
    %2102 = vmatprep.subr.mxu0 %v90
    %2103 = vmatpush1.msra.mxu0 %v89
    %2104 = vmatprep.subr.mxu0 %v94
    %2105 = vmatpush1.msra.mxu0 %v93
    %2106 = vmatprep.subr.mxu0 %v98
    %2107 = vmatpush1.msra.mxu0 %v97
    %2108 = vmatprep.subr.mxu0 %v102
    %2109 = vmatpush1.msra.mxu0 %v101
    %2110 = vmatprep.subr.mxu0 %v106
    %2111 = vmatpush1.msra.mxu0 %v105
    %2112 = vmatprep.subr.mxu0 %v110
    %2113 = vmatpush1.msra.mxu0 %v109
    %2114 = vmatprep.subr.mxu0 %v114
    %2115 = vmatpush1.msra.mxu0 %v113
    %2116 = vmatprep.subr.mxu0 %v118
    %2117 = vmatpush1.msra.mxu0 %v117
    %2118 = vmatprep.subr.mxu0 %v122
    %2119 = vmatpush1.msra.mxu0 %v121
    %2120 = vmatprep.subr.mxu0 %v126
    %2121 = vmatpush1.msra.mxu0 %v125
    %2122 = vmatprep.subr.mxu0 %v130
    %2123 = vmatpush1.msra.mxu0 %v129
    %2124 = vmatprep.subr.mxu0 %v134
    %2125 = vmatpush1.msra.mxu0 %v133
    %2126 = vmatprep.subr.mxu0 %v138
    %2127 = vmatpush1.msra.mxu0 %v137
    %2128 = vmatprep.subr.mxu0 %v142
    %2129 = vmatpush1.msra.mxu0 %v141
    %2130 = vmatprep.subr.mxu0 0.0
    %2131 = vmatpush1.msra.mxu0 0.0
    %2132 = vmatprep.subr.mxu0 0.0
    %2133 = vmatpush1.msra.mxu0 0.0
    %2134 = vmatprep.subr.mxu0 0.0
    %2135 = vmatpush1.msra.mxu0 0.0
    %2136 = vmatprep.subr.mxu0 0.0
    %2137 = vmatpush1.msra.mxu0 0.0
    %2138 = vmatprep.subr.mxu0 0.0
    %2139 = vmatpush1.msra.mxu0 0.0
    %2140 = vmatprep.subr.mxu0 0.0
    %2141 = vmatpush1.msra.mxu0 0.0
    %2142 = vmatprep.subr.mxu0 0.0
    %2143 = vmatpush1.msra.mxu0 0.0
    %2144 = vmatprep.subr.mxu0 0.0
    %2145 = vmatpush1.msra.mxu0 0.0
    %2146 = vmatprep.subr.mxu0 0.0
    %2147 = vmatpush1.msra.mxu0 0.0
    %2148 = vmatprep.subr.mxu0 0.0
    %2149 = vmatpush1.msra.mxu0 0.0
    %2150 = vmatprep.subr.mxu0 0.0
    %2151 = vmatpush1.msra.mxu0 0.0
    %2152 = vmatprep.subr.mxu0 0.0
    %2153 = vmatpush1.msra.mxu0 0.0
    %2154 = vmatprep.subr.mxu0 0.0
    %2155 = vmatpush1.msra.mxu0 0.0
    %2156 = vmatprep.subr.mxu0 0.0
    %2157 = vmatpush1.msra.mxu0 0.0
    %2158 = vmatprep.subr.mxu0 0.0
    %2159 = vmatpush1.msra.mxu0 0.0
    %2160 = vmatprep.subr.mxu0 0.0
    %2161 = vmatpush1.msra.mxu0 0.0
    %2162 = vmatprep.mubr.f32.mxu0 0.0
    %2163 = vmatmul.mubr.f32.gmra.mrb[0].mxu0 %v2096
    %v2164 = vpop.f32.mrb[0].mxu0
    %v2165 = vadd.f32 0.0, %v2164
    %v2166 = vpop.f32.mrb[0].mxu0
    %v2167 = vadd.f32 0.0, %v2166
    %2168 = vdwg.mxu0
    %2169 = vmatprep.subr.mxu0 %v84
    %2170 = vmatpush1.msra.mxu0 %v83
    %2171 = vmatprep.subr.mxu0 %v88
    %2172 = vmatpush1.msra.mxu0 %v87
    %2173 = vmatprep.subr.mxu0 %v92
    %2174 = vmatpush1.msra.mxu0 %v91
    %2175 = vmatprep.subr.mxu0 %v96
    %2176 = vmatpush1.msra.mxu0 %v95
    %2177 = vmatprep.subr.mxu0 %v100
    %2178 = vmatpush1.msra.mxu0 %v99
    %2179 = vmatprep.subr.mxu0 %v104
    %2180 = vmatpush1.msra.mxu0 %v103
    %2181 = vmatprep.subr.mxu0 %v108
    %2182 = vmatpush1.msra.mxu0 %v107
    %2183 = vmatprep.subr.mxu0 %v112
    %2184 = vmatpush1.msra.mxu0 %v111
    %2185 = vmatprep.subr.mxu0 %v116
    %2186 = vmatpush1.msra.mxu0 %v115
    %2187 = vmatprep.subr.mxu0 %v120
    %2188 = vmatpush1.msra.mxu0 %v119
    %2189 = vmatprep.subr.mxu0 %v124
    %2190 = vmatpush1.msra.mxu0 %v123
    %2191 = vmatprep.subr.mxu0 %v128
    %2192 = vmatpush1.msra.mxu0 %v127
    %2193 = vmatprep.subr.mxu0 %v132
    %2194 = vmatpush1.msra.mxu0 %v131
    %2195 = vmatprep.subr.mxu0 %v136
    %2196 = vmatpush1.msra.mxu0 %v135
    %2197 = vmatprep.subr.mxu0 %v140
    %2198 = vmatpush1.msra.mxu0 %v139
    %2199 = vmatprep.subr.mxu0 %v144
    %2200 = vmatpush1.msra.mxu0 %v143
    %2201 = vmatprep.subr.mxu0 0.0
    %2202 = vmatpush1.msra.mxu0 0.0
    %2203 = vmatprep.subr.mxu0 0.0
    %2204 = vmatpush1.msra.mxu0 0.0
    %2205 = vmatprep.subr.mxu0 0.0
    %2206 = vmatpush1.msra.mxu0 0.0
    %2207 = vmatprep.subr.mxu0 0.0
    %2208 = vmatpush1.msra.mxu0 0.0
    %2209 = vmatprep.subr.mxu0 0.0
    %2210 = vmatpush1.msra.mxu0 0.0
    %2211 = vmatprep.subr.mxu0 0.0
    %2212 = vmatpush1.msra.mxu0 0.0
    %2213 = vmatprep.subr.mxu0 0.0
    %2214 = vmatpush1.msra.mxu0 0.0
    %2215 = vmatprep.subr.mxu0 0.0
    %2216 = vmatpush1.msra.mxu0 0.0
    %2217 = vmatprep.subr.mxu0 0.0
    %2218 = vmatpush1.msra.mxu0 0.0
    %2219 = vmatprep.subr.mxu0 0.0
    %2220 = vmatpush1.msra.mxu0 0.0
    %2221 = vmatprep.subr.mxu0 0.0
    %2222 = vmatpush1.msra.mxu0 0.0
    %2223 = vmatprep.subr.mxu0 0.0
    %2224 = vmatpush1.msra.mxu0 0.0
    %2225 = vmatprep.subr.mxu0 0.0
    %2226 = vmatpush1.msra.mxu0 0.0
    %2227 = vmatprep.subr.mxu0 0.0
    %2228 = vmatpush1.msra.mxu0 0.0
    %2229 = vmatprep.subr.mxu0 0.0
    %2230 = vmatpush1.msra.mxu0 0.0
    %2231 = vmatprep.subr.mxu0 0.0
    %2232 = vmatpush1.msra.mxu0 0.0
    %2233 = vmatprep.mubr.f32.mxu0 0.0
    %2234 = vmatmul.mubr.f32.gmra.mrb[0].mxu0 %v2096
    %v2235 = vpop.f32.mrb[0].mxu0
    %v2236 = vadd.f32 0.0, %v2235
    %v2237 = vpop.f32.mrb[0].mxu0
    %v2238 = vadd.f32 0.0, %v2237
    %2239 = vdwg.mxu0
    %v2244 = vrot.slane %v2165, 1
    %v2245 = vrot.slane %v2167, 1
    %v2246 = vrot.slane %v2236, 1
    %v2247 = vrot.slane %v2238, 1
    %v2252 = vadd.f32 %v74, %v2244
    %v2253 = vadd.f32 %v75, %v2245
    %v2254 = vadd.f32 %v76, %v2246
    %v2255 = vadd.f32 %v77, %v2247
    %v2257 = vrot.slane %v2087, 6
    %2259 = vmatprep.subr.mxu0 0.0
    %2260 = vmatpush1.msra.mxu0 %v291
    %2261 = vmatprep.subr.mxu0 0.0
    %2262 = vmatpush1.msra.mxu0 %v292
    %2263 = vmatprep.subr.mxu0 0.0
    %2264 = vmatpush1.msra.mxu0 %v293
    %2265 = vmatprep.subr.mxu0 0.0
    %2266 = vmatpush1.msra.mxu0 %v294
    %2267 = vmatprep.subr.mxu0 0.0
    %2268 = vmatpush1.msra.mxu0 %v295
    %2269 = vmatprep.subr.mxu0 0.0
    %2270 = vmatpush1.msra.mxu0 %v296
    %2271 = vmatprep.subr.mxu0 0.0
    %2272 = vmatpush1.msra.mxu0 %v297
    %2273 = vmatprep.subr.mxu0 0.0
    %2274 = vmatpush1.msra.mxu0 %v298
    %2275 = vmatprep.subr.mxu0 0.0
    %2276 = vmatpush1.msra.mxu0 %v299
    %2277 = vmatprep.subr.mxu0 0.0
    %2278 = vmatpush1.msra.mxu0 %v300
    %2279 = vmatprep.subr.mxu0 0.0
    %2280 = vmatpush1.msra.mxu0 %v301
    %2281 = vmatprep.subr.mxu0 0.0
    %2282 = vmatpush1.msra.mxu0 %v302
    %2283 = vmatprep.subr.mxu0 0.0
    %2284 = vmatpush1.msra.mxu0 %v303
    %2285 = vmatprep.subr.mxu0 0.0
    %2286 = vmatpush1.msra.mxu0 %v304
    %2287 = vmatprep.subr.mxu0 0.0
    %2288 = vmatpush1.msra.mxu0 %v305
    %2289 = vmatprep.subr.mxu0 0.0
    %2290 = vmatpush1.msra.mxu0 %v306
    %2291 = vmatprep.subr.mxu0 0.0
    %2292 = vmatpush1.msra.mxu0 0.0
    %2293 = vmatprep.subr.mxu0 0.0
    %2294 = vmatpush1.msra.mxu0 0.0
    %2295 = vmatprep.subr.mxu0 0.0
    %2296 = vmatpush1.msra.mxu0 0.0
    %2297 = vmatprep.subr.mxu0 0.0
    %2298 = vmatpush1.msra.mxu0 0.0
    %2299 = vmatprep.subr.mxu0 0.0
    %2300 = vmatpush1.msra.mxu0 0.0
    %2301 = vmatprep.subr.mxu0 0.0
    %2302 = vmatpush1.msra.mxu0 0.0
    %2303 = vmatprep.subr.mxu0 0.0
    %2304 = vmatpush1.msra.mxu0 0.0
    %2305 = vmatprep.subr.mxu0 0.0
    %2306 = vmatpush1.msra.mxu0 0.0
    %2307 = vmatprep.subr.mxu0 0.0
    %2308 = vmatpush1.msra.mxu0 0.0
    %2309 = vmatprep.subr.mxu0 0.0
    %2310 = vmatpush1.msra.mxu0 0.0
    %2311 = vmatprep.subr.mxu0 0.0
    %2312 = vmatpush1.msra.mxu0 0.0
    %2313 = vmatprep.subr.mxu0 0.0
    %2314 = vmatpush1.msra.mxu0 0.0
    %2315 = vmatprep.subr.mxu0 0.0
    %2316 = vmatpush1.msra.mxu0 0.0
    %2317 = vmatprep.subr.mxu0 0.0
    %2318 = vmatpush1.msra.mxu0 0.0
    %2319 = vmatprep.subr.mxu0 0.0
    %2320 = vmatpush1.msra.mxu0 0.0
    %2321 = vmatprep.subr.mxu0 0.0
    %2322 = vmatpush1.msra.mxu0 0.0
    %2323 = vmatprep.mubr.f32.mxu0 0.0
    %2324 = vmatmul.mubr.f32.gmra.mrb[0].mxu0 %v2257
    %v2325 = vpop.f32.mrb[0].mxu0
    %v2326 = vadd.f32 0.0, %v2325
    %v2327 = vpop.f32.mrb[0].mxu0
    %2328 = vdwg.mxu0
    %v2329 = vadd.f32 %v68, %v2326
    %v2330 = vtanh.pop %v2329
    %v2332 = vlaneseq
    %v2333 = vshrl.u32 %v2332, 7
    %v2334 = vsub.s32 0, %v2333
    %v2335 = vrot.slane %v2330, %v2334
    %v2337 = vsub.f32 %v2087, %v2335
    %v2338 = vstv %s2094
    %v2339 = vmul.f32 %v2330, %v2338
    %v2341 = vlaneseq
    %v2342 = vshrl.u32 %v2341, 7
    %v2343 = vsub.s32 0, %v2342
    %v2344 = vrot.slane %v2339, %v2343
    %v2346 = vadd.f32 %v2337, %v2344
    %v2347 = vxor.u32 %v2252, 2147483648
    %v2348 = vmul.f32 %v2347, 1.442695
    %v2349 = vpow.pop %v2348
    %v2350 = vadd.f32 %v2349, 1.0
    %v2351 = vrcp.pop %v2350
    %v2352 = vmul.f32 1.0, %v2351
    %v2353 = vxor.u32 %v2253, 2147483648
    %v2354 = vmul.f32 %v2353, 1.442695
    %v2355 = vpow.pop %v2354
    %v2356 = vadd.f32 %v2355, 1.0
    %v2357 = vrcp.pop %v2356
    %v2358 = vmul.f32 1.0, %v2357
    %v2359 = vxor.u32 %v2254, 2147483648
    %v2360 = vmul.f32 %v2359, 1.442695
    %v2361 = vpow.pop %v2360
    %v2362 = vadd.f32 %v2361, 1.0
    %v2363 = vrcp.pop %v2362
    %v2364 = vmul.f32 1.0, %v2363
    %v2365 = vtanh.pop %v2255
    %v2367 = vrot.slane %v2346, 7
    %v2369 = vmul.f32 %v2358, %v2367
    %v2370 = vmul.f32 %v2352, %v2365
    %v2371 = vadd.f32 %v2369, %v2370
    %v2372 = vtanh.pop %v2087
    %v2374 = vrot.slane %v2372, 7
    %v2376 = vmul.f32 %v2364, %v2374
    %vm2377 = vcmask 1040384
    %v2378 = vsel %vm2377, %v406, %v672
    %vm2379 = vcmask 1041408
    %v2380 = vsel %vm2379, %v2378, %v956
    %vm2381 = vcmask 1042432
    %v2382 = vsel %vm2381, %v2380, %v1240
    %vm2383 = vcmask 1043456
    %v2384 = vsel %vm2383, %v2382, %v1524
    %vm2385 = vcmask 1044480
    %v2386 = vsel %vm2385, %v2384, %v1808
    %vm2387 = vcmask 1045504
    %v2388 = vsel %vm2387, %v2386, %v2092
    %vm2389 = vcmask 1046528
    %v2390 = vsel %vm2389, %v2388, %v2376
    %2391 = vst [vmem:[#allocation11] sm:$0xff] %v2390
    %2392 = vst [vmem:[#allocation2 - $0x7] sm:$0x80] %v2376
    %2393 = vst [vmem:[#allocation3 - $0x7] sm:$0x80] %v2371
    // Predicated region
    $region38: #{forward.1} parent=1 // pred_check
      _
    $region39: #{forward.1} parent=1 // pred_check_branch
      %2395 = sbr.rel (0) target = $region41
    $region40: #{forward.1} parent=1 // pred_region
      %s2397 = ssub.s32 128, 128
      %2398 = vsyncadd [#allocation6], %s2397
      %s2400 = sshll.u32 [#allocation11], 4
      %s2401 = int_to_ptr.vmem [resolvable:$true] %s2400
      %2403 = dma.vmem_to_hbm [thread:$0]  %s2401, 128, %s5, [#allocation6]
    $region41: #{forward.1} parent=1 // pred_fallthru
      _
    // Predicated region
    $region42: #{forward.1} parent=1 // pred_check
      _
    $region43: #{forward.1} parent=1 // pred_check_branch
      %2405 = sbr.rel (0) target = $region45
    $region44: #{forward.1} parent=1 // pred_region
      %2406 = dma.done [#allocation6], 128
    $region45: #{forward.1} parent=1 // pred_fallthru
      _
    %2407 = vsyncpa [#allocation5], 1
    %2408 = vsyncpa [#allocation10], 1
    %2409 = vsyncpa [#allocation6], 1
    %2410 = vsyncpa [#allocation7], 1

</llo_original>
